<compile_context>
chip_gen: v5e
topology: v5e:2x2
jax: 0.10.0
libtpu: 0.0.40
codegen_flags: <defaults>
</compile_context>

<pallas_src>
import jax
import jax.numpy as jnp
from jax.experimental import pallas as pl
from jax.experimental.pallas import tpu as pltpu  # noqa: F401 (kept for TPU-specific extensions)

# ---- scaled-down ViT-tiny-like config (deterministic synthetic weights) ----
B = 2                      # batch
C = 3                      # ViT expects RGB
IMG = 32                   # spatial
PATCH = 16                 # patch size (like vit-tiny-patch16)
N_PATCH = (IMG // PATCH) ** 2          # 4 patches
SEQ = N_PATCH + 1                      # 5 tokens (CLS + patches)
SEQ_PAD = 8                            # sublane-aligned tokens per image
HIDDEN = 64
HEADS = 2
HEAD_DIM = HIDDEN // HEADS
MLP = 128
LAYERS = 2
EPS = 1e-12                # HF ViT layer_norm_eps
SCALE = 1.0 / (HEAD_DIM ** 0.5)


def _layernorm(v, g, b):
    mu = jnp.mean(v, axis=-1, keepdims=True)
    var = jnp.mean((v - mu) ** 2, axis=-1, keepdims=True)
    return (v - mu) * jax.lax.rsqrt(var + EPS) * g + b


# ---------------------------- fused Pallas kernel ----------------------------
def vit_fused_kernel(patches_ref, pw_ref, asm_ref, base_ref, bias_ref, pool_ref,
                     wqkv_ref, wo_ref, w1_ref, w2_ref, vec_ref, out_ref):
    # --- patch embedding (Conv2d k=stride=PATCH as ONE matmul over all images) ---
    tok = jnp.dot(patches_ref[...], pw_ref[...],
                  preferred_element_type=jnp.float32)            # (B*N_PATCH, D)
    # constant-scatter assembly into the padded, sublane-aligned token slab:
    #   rows b*8+0      -> CLS + pos[0]            (from base)
    #   rows b*8+1..4   -> patch tok + pos + conv bias
    #   rows b*8+5..7   -> zero padding (masked everywhere downstream)
    h = jnp.dot(asm_ref[...], tok,
                preferred_element_type=jnp.float32) + base_ref[...]   # (B*SEQ_PAD, D)

    bias = bias_ref[...]                                          # block-diag + pad mask

    for l in range(LAYERS):                                       # static layer unroll
        vec = vec_ref[l]                                          # (8, 3*HIDDEN) vector slab
        ln1g = vec[0:1, 0:HIDDEN]
        ln1b = vec[1:2, 0:HIDDEN]
        bqkv = vec[2:3, :]                                        # (1, 3*HIDDEN)
        bo = vec[3:4, 0:HIDDEN]
        ln2g = vec[4:5, 0:HIDDEN]
        ln2b = vec[5:6, 0:HIDDEN]
        b1 = vec[6:7, 0:MLP]
        b2 = vec[7:8, 0:HIDDEN]

        wqkv = wqkv_ref[l]                                        # (HIDDEN, 3*HIDDEN)
        wo = wo_ref[l]                                            # (HIDDEN, HIDDEN)
        w1 = w1_ref[l]                                            # (HIDDEN, MLP)
        w2 = w2_ref[l]                                            # (MLP, HIDDEN)

        # --- pre-LN multi-head self-attention (all images batched via mask) ---
        ln1 = _layernorm(h, ln1g, ln1b)
        qkv = jnp.dot(ln1, wqkv, preferred_element_type=jnp.float32) + bqkv

        attn = None
        for hd in range(HEADS):                                   # static head loop
            qh = qkv[:, hd * HEAD_DIM:(hd + 1) * HEAD_DIM]        # scale folded into wq/bq
            kh = qkv[:, HIDDEN + hd * HEAD_DIM: HIDDEN + (hd + 1) * HEAD_DIM]
            vh = qkv[:, 2 * HIDDEN + hd * HEAD_DIM: 2 * HIDDEN + (hd + 1) * HEAD_DIM]
            # contracting ((1,),(1,)) == q @ k^T without materializing the transpose
            scores = jax.lax.dot_general(qh, kh, (((1,), (1,)), ((), ())),
                                         preferred_element_type=jnp.float32) + bias
            m = jnp.max(scores, axis=-1, keepdims=True)
            e = jnp.exp(scores - m)
            probs = e * pl.reciprocal(jnp.sum(e, axis=-1, keepdims=True), approx=True)
            ctx = jnp.dot(probs, vh, preferred_element_type=jnp.float32)
            # per-head accumulation through wo row-block (no lane concat / relayout)
            part = jnp.dot(ctx, wo[hd * HEAD_DIM:(hd + 1) * HEAD_DIM, :],
                           preferred_element_type=jnp.float32)
            attn = part if attn is None else attn + part

        h = h + attn + bo                                         # residual 1

        # --- pre-LN MLP ---
        ln2 = _layernorm(h, ln2g, ln2b)
        # TODO(synk): HF ViT uses exact (erf) GELU; tanh-approximate GELU used here.
        mid = jax.nn.gelu(jnp.dot(ln2, w1, preferred_element_type=jnp.float32) + b1,
                          approximate=True)
        h = h + jnp.dot(mid, w2, preferred_element_type=jnp.float32) + b2  # residual 2

    # --- hidden_states[-1].mean(dim=1): one matmul with constant pooling matrix ---
    out_ref[...] = jnp.dot(pool_ref[...], h, preferred_element_type=jnp.float32)


# ---------------------------- wrapper ----------------------------
def vit_backbone(x, params):
    # x: (B, C, IMG, IMG)  NCHW, like the PyTorch module's input
    bx = x.shape[0]
    assert bx == B
    g = IMG // PATCH
    # Non-overlapping patch extraction == Conv2d(kernel=stride=PATCH);
    # within-patch flatten order (c, ph, pw) matches flattened conv weight.
    patches = x.reshape(bx, C, g, PATCH, g, PATCH)
    patches = patches.transpose(0, 2, 4, 1, 3, 5)                 # (B, gi, gj, C, P, P)
    patches = patches.reshape(bx * N_PATCH, C * PATCH * PATCH)

    cls, pos, pb = params["cls"], params["pos"], params["patch_b"]

    # base: per-image 8-row block = [CLS+pos0, pos1..4 + conv bias, 0, 0, 0]
    blk = jnp.concatenate([cls + pos[0:1],
                           pos[1:SEQ] + pb,
                           jnp.zeros((SEQ_PAD - SEQ, HIDDEN), jnp.float32)], axis=0)
    base = jnp.tile(blk, (bx, 1))                                 # (B*SEQ_PAD, HIDDEN)

    rows = jnp.arange(bx * SEQ_PAD, dtype=jnp.int32)
    cols = jnp.arange(bx * N_PATCH, dtype=jnp.int32)
    r_img, r_tok = rows // SEQ_PAD, rows % SEQ_PAD
    c_img, c_p = cols // N_PATCH, cols % N_PATCH

    # constant scatter matrix: patch p of image b -> padded row b*8 + 1 + p
    asm = ((r_img[:, None] == c_img[None, :]) &
           (r_tok[:, None] == c_p[None, :] + 1)).astype(jnp.float32)

    # block-diagonal additive attention bias on the padded layout; pad rows are
    # masked as keys only (so every query row keeps >=1 unmasked entry -> no NaN)
    valid = r_tok < SEQ
    same = r_img[:, None] == r_img[None, :]
    attn_bias = jnp.where(same & valid[None, :], 0.0, -1e30).astype(jnp.float32)

    # pooling matrix implementing per-image mean over the SEQ real tokens
    pool = ((r_img[None, :] == jnp.arange(bx, dtype=jnp.int32)[:, None])
            & valid[None, :]).astype(jnp.float32) / SEQ           # (B, B*SEQ_PAD)

    # ---- pack per-layer parameters into a few stacked slabs (fewer DMAs) ----
    Ls = params["layers"]
    wqkv_all = jnp.stack([jnp.concatenate([lp["wq"], lp["wk"], lp["wv"]], axis=1)
                          for lp in Ls])                          # (L, HIDDEN, 3*HIDDEN)
    wo_all = jnp.stack([lp["wo"] for lp in Ls])                   # (L, HIDDEN, HIDDEN)
    w1_all = jnp.stack([lp["w1"] for lp in Ls])                   # (L, HIDDEN, MLP)
    w2_all = jnp.stack([lp["w2"] for lp in Ls])                   # (L, MLP, HIDDEN)

    def _pad(v, w=3 * HIDDEN):
        return jnp.pad(v, ((0, 0), (0, w - v.shape[1])))

    vec_all = jnp.stack([jnp.concatenate([
        _pad(lp["ln1_g"]), _pad(lp["ln1_b"]),
        jnp.concatenate([lp["bq"], lp["bk"], lp["bv"]], axis=1),
        _pad(lp["bo"]), _pad(lp["ln2_g"]), _pad(lp["ln2_b"]),
        _pad(lp["b1"]), _pad(lp["b2"])], axis=0) for lp in Ls])   # (L, 8, 3*HIDDEN)

    return pl.pallas_call(
        vit_fused_kernel,
        out_shape=jax.ShapeDtypeStruct((bx, HIDDEN), jnp.float32),
    )(patches, params["patch_w"], asm, base, attn_bias, pool,
      wqkv_all, wo_all, w1_all, w2_all, vec_all)


def init_params(key):
    def nrm(k, shape, scale=0.02):
        return scale * jax.random.normal(k, shape, jnp.float32)

    keys = iter(jax.random.split(key, 64))
    params = {
        "patch_w": nrm(next(keys), (C * PATCH * PATCH, HIDDEN)),   # conv weight, (c,ph,pw) x D
        "patch_b": nrm(next(keys), (1, HIDDEN)),
        "cls": nrm(next(keys), (1, HIDDEN)),
        "pos": nrm(next(keys), (SEQ, HIDDEN)),
        "layers": [],
    }
    for _ in range(LAYERS):
        wq = nrm(next(keys), (HIDDEN, HIDDEN))
        bq = nrm(next(keys), (1, HIDDEN))
        lp = {
            "ln1_g": jnp.ones((1, HIDDEN), jnp.float32),
            "ln1_b": jnp.zeros((1, HIDDEN), jnp.float32),
            # attention scale 1/sqrt(head_dim) folded into the query projection (init-time)
            "wq": wq * SCALE, "bq": bq * SCALE,
            "wk": nrm(next(keys), (HIDDEN, HIDDEN)), "bk": nrm(next(keys), (1, HIDDEN)),
            "wv": nrm(next(keys), (HIDDEN, HIDDEN)), "bv": nrm(next(keys), (1, HIDDEN)),
            "wo": nrm(next(keys), (HIDDEN, HIDDEN)), "bo": nrm(next(keys), (1, HIDDEN)),
            "ln2_g": jnp.ones((1, HIDDEN), jnp.float32),
            "ln2_b": jnp.zeros((1, HIDDEN), jnp.float32),
            "w1": nrm(next(keys), (HIDDEN, MLP)), "b1": nrm(next(keys), (1, MLP)),
            "w2": nrm(next(keys), (MLP, HIDDEN)), "b2": nrm(next(keys), (1, HIDDEN)),
        }
        params["layers"].append(lp)
    return params


if __name__ == "__main__":
    key = jax.random.PRNGKey(0)
    pkey, xkey = jax.random.split(key)
    params = init_params(pkey)
    x = jax.random.normal(xkey, (B, C, IMG, IMG), jnp.float32)

    out = vit_backbone(x, params)
    out = jax.block_until_ready(out)
    assert out.shape == (B, HIDDEN) and out.dtype == jnp.float32
    assert bool(jnp.all(jnp.isfinite(out)))
    print("KERNEL_OK")
</pallas_src>

<mosaic_0001>
module attributes {stable_mosaic.version = 11 : i64} {
  func.func @vit_fused_kernel(%arg0: memref<8x768xf32, #tpu.memory_space<vmem>>, %arg1: memref<768x64xf32, #tpu.memory_space<vmem>>, %arg2: memref<16x8xf32, #tpu.memory_space<vmem>>, %arg3: memref<16x64xf32, #tpu.memory_space<vmem>>, %arg4: memref<16x16xf32, #tpu.memory_space<vmem>>, %arg5: memref<2x16xf32, #tpu.memory_space<vmem>>, %arg6: memref<2x64x192xf32, #tpu.memory_space<vmem>>, %arg7: memref<2x64x64xf32, #tpu.memory_space<vmem>>, %arg8: memref<2x64x128xf32, #tpu.memory_space<vmem>>, %arg9: memref<2x128x64xf32, #tpu.memory_space<vmem>>, %arg10: memref<2x8x192xf32, #tpu.memory_space<vmem>>, %arg11: memref<2x64xf32, #tpu.memory_space<vmem>>) attributes {dimension_semantics = [], scalar_prefetch = 0 : i64, scratch_operands = 0 : i64, tpu.core_type = #tpu.core_type<tc>} {
    %c0 = arith.constant 0 : index
    %c0_0 = arith.constant 0 : index
    %0 = vector.load %arg0[%c0, %c0_0] : memref<8x768xf32, #tpu.memory_space<vmem>>, vector<8x768xf32>
    %c0_1 = arith.constant 0 : index
    %c0_2 = arith.constant 0 : index
    %1 = vector.load %arg1[%c0_1, %c0_2] : memref<768x64xf32, #tpu.memory_space<vmem>>, vector<768x64xf32>
    %cst = arith.constant dense<0.000000e+00> : vector<8x64xf32>
    %2 = tpu.matmul %0, %1, %cst {dimension_numbers = #tpu.dot_dimension_numbers<[1], [0], [0], [1], [0, 0, 1, 1], [], []>} : vector<8x768xf32>, vector<768x64xf32>, vector<8x64xf32> -> vector<8x64xf32>
    %c0_3 = arith.constant 0 : index
    %c0_4 = arith.constant 0 : index
    %3 = vector.load %arg2[%c0_3, %c0_4] : memref<16x8xf32, #tpu.memory_space<vmem>>, vector<16x8xf32>
    %cst_5 = arith.constant dense<0.000000e+00> : vector<16x64xf32>
    %4 = tpu.matmul %3, %2, %cst_5 {dimension_numbers = #tpu.dot_dimension_numbers<[1], [0], [0], [1], [0, 0, 1, 1], [], []>} : vector<16x8xf32>, vector<8x64xf32>, vector<16x64xf32> -> vector<16x64xf32>
    %c0_6 = arith.constant 0 : index
    %c0_7 = arith.constant 0 : index
    %5 = vector.load %arg3[%c0_6, %c0_7] : memref<16x64xf32, #tpu.memory_space<vmem>>, vector<16x64xf32>
    %6 = arith.addf %4, %5 : vector<16x64xf32>
    %c0_8 = arith.constant 0 : index
    %c0_9 = arith.constant 0 : index
    %7 = vector.load %arg4[%c0_8, %c0_9] : memref<16x16xf32, #tpu.memory_space<vmem>>, vector<16x16xf32>
    %c0_10 = arith.constant 0 : index
    %c0_11 = arith.constant 0 : index
    %c0_12 = arith.constant 0 : index
    %8 = vector.load %arg10[%c0_10, %c0_11, %c0_12] : memref<2x8x192xf32, #tpu.memory_space<vmem>>, vector<1x8x192xf32>
    %9 = vector.shape_cast %8 : vector<1x8x192xf32> to vector<8x192xf32>
    %10 = vector.extract_strided_slice %9 {offsets = [0, 0], sizes = [1, 64], strides = [1, 1]} : vector<8x192xf32> to vector<1x64xf32>
    %11 = vector.extract_strided_slice %9 {offsets = [1, 0], sizes = [1, 64], strides = [1, 1]} : vector<8x192xf32> to vector<1x64xf32>
    %12 = vector.extract_strided_slice %9 {offsets = [2, 0], sizes = [1, 192], strides = [1, 1]} : vector<8x192xf32> to vector<1x192xf32>
    %13 = vector.extract_strided_slice %9 {offsets = [3, 0], sizes = [1, 64], strides = [1, 1]} : vector<8x192xf32> to vector<1x64xf32>
    %14 = vector.extract_strided_slice %9 {offsets = [4, 0], sizes = [1, 64], strides = [1, 1]} : vector<8x192xf32> to vector<1x64xf32>
    %15 = vector.extract_strided_slice %9 {offsets = [5, 0], sizes = [1, 64], strides = [1, 1]} : vector<8x192xf32> to vector<1x64xf32>
    %16 = vector.extract_strided_slice %9 {offsets = [6, 0], sizes = [1, 128], strides = [1, 1]} : vector<8x192xf32> to vector<1x128xf32>
    %17 = vector.extract_strided_slice %9 {offsets = [7, 0], sizes = [1, 64], strides = [1, 1]} : vector<8x192xf32> to vector<1x64xf32>
    %c0_13 = arith.constant 0 : index
    %c0_14 = arith.constant 0 : index
    %c0_15 = arith.constant 0 : index
    %18 = vector.load %arg6[%c0_13, %c0_14, %c0_15] : memref<2x64x192xf32, #tpu.memory_space<vmem>>, vector<1x64x192xf32>
    %19 = vector.shape_cast %18 : vector<1x64x192xf32> to vector<64x192xf32>
    %c0_16 = arith.constant 0 : index
    %c0_17 = arith.constant 0 : index
    %c0_18 = arith.constant 0 : index
    %20 = vector.load %arg7[%c0_16, %c0_17, %c0_18] : memref<2x64x64xf32, #tpu.memory_space<vmem>>, vector<1x64x64xf32>
    %21 = vector.shape_cast %20 : vector<1x64x64xf32> to vector<64x64xf32>
    %c0_19 = arith.constant 0 : index
    %c0_20 = arith.constant 0 : index
    %c0_21 = arith.constant 0 : index
    %22 = vector.load %arg8[%c0_19, %c0_20, %c0_21] : memref<2x64x128xf32, #tpu.memory_space<vmem>>, vector<1x64x128xf32>
    %23 = vector.shape_cast %22 : vector<1x64x128xf32> to vector<64x128xf32>
    %c0_22 = arith.constant 0 : index
    %c0_23 = arith.constant 0 : index
    %c0_24 = arith.constant 0 : index
    %24 = vector.load %arg9[%c0_22, %c0_23, %c0_24] : memref<2x128x64xf32, #tpu.memory_space<vmem>>, vector<1x128x64xf32>
    %25 = vector.shape_cast %24 : vector<1x128x64xf32> to vector<128x64xf32>
    %cst_25 = arith.constant dense<0.000000e+00> : vector<16xf32>
    %26 = vector.multi_reduction <add>, %6, %cst_25 [1] : vector<16x64xf32> to vector<16xf32>
    %27 = vector.shape_cast %26 : vector<16xf32> to vector<16x1xf32>
    %cst_26 = arith.constant 6.400000e+01 : f32
    %28 = vector.broadcast %cst_26 : f32 to vector<16x1xf32>
    %29 = arith.divf %27, %28 : vector<16x1xf32>
    %30 = vector.broadcast %29 : vector<16x1xf32> to vector<16x64xf32>
    %31 = arith.subf %6, %30 : vector<16x64xf32>
    %32 = arith.mulf %31, %31 : vector<16x64xf32>
    %cst_27 = arith.constant dense<0.000000e+00> : vector<16xf32>
    %33 = vector.multi_reduction <add>, %32, %cst_27 [1] : vector<16x64xf32> to vector<16xf32>
    %34 = vector.shape_cast %33 : vector<16xf32> to vector<16x1xf32>
    %cst_28 = arith.constant 6.400000e+01 : f32
    %35 = vector.broadcast %cst_28 : f32 to vector<16x1xf32>
    %36 = arith.divf %34, %35 : vector<16x1xf32>
    %37 = vector.broadcast %29 : vector<16x1xf32> to vector<16x64xf32>
    %38 = arith.subf %6, %37 : vector<16x64xf32>
    %cst_29 = arith.constant 9.99999996E-13 : f32
    %39 = vector.broadcast %cst_29 : f32 to vector<16x1xf32>
    %40 = arith.addf %36, %39 : vector<16x1xf32>
    %41 = math.rsqrt %40 : vector<16x1xf32>
    %42 = vector.broadcast %41 : vector<16x1xf32> to vector<16x64xf32>
    %43 = arith.mulf %38, %42 : vector<16x64xf32>
    %44 = vector.broadcast %10 : vector<1x64xf32> to vector<16x64xf32>
    %45 = arith.mulf %43, %44 : vector<16x64xf32>
    %46 = vector.broadcast %11 : vector<1x64xf32> to vector<16x64xf32>
    %47 = arith.addf %45, %46 : vector<16x64xf32>
    %cst_30 = arith.constant dense<0.000000e+00> : vector<16x192xf32>
    %48 = tpu.matmul %47, %19, %cst_30 {dimension_numbers = #tpu.dot_dimension_numbers<[1], [0], [0], [1], [0, 0, 1, 1], [], []>} : vector<16x64xf32>, vector<64x192xf32>, vector<16x192xf32> -> vector<16x192xf32>
    %49 = vector.broadcast %12 : vector<1x192xf32> to vector<16x192xf32>
    %50 = arith.addf %48, %49 : vector<16x192xf32>
    %51 = vector.extract_strided_slice %50 {offsets = [0, 0], sizes = [16, 32], strides = [1, 1]} : vector<16x192xf32> to vector<16x32xf32>
    %52 = vector.extract_strided_slice %50 {offsets = [0, 64], sizes = [16, 32], strides = [1, 1]} : vector<16x192xf32> to vector<16x32xf32>
    %53 = vector.extract_strided_slice %50 {offsets = [0, 128], sizes = [16, 32], strides = [1, 1]} : vector<16x192xf32> to vector<16x32xf32>
    %cst_31 = arith.constant dense<0.000000e+00> : vector<16x16xf32>
    %54 = tpu.matmul %51, %52, %cst_31 {dimension_numbers = #tpu.dot_dimension_numbers<[1], [1], [0], [0], [0, 0, 1, 0], [], []>} : vector<16x32xf32>, vector<16x32xf32>, vector<16x16xf32> -> vector<16x16xf32>
    %55 = arith.addf %54, %7 : vector<16x16xf32>
    %cst_32 = arith.constant dense<0xFF800000> : vector<16xf32>
    %56 = vector.multi_reduction <maximumf>, %55, %cst_32 [1] : vector<16x16xf32> to vector<16xf32>
    %57 = vector.shape_cast %56 : vector<16xf32> to vector<16x1xf32>
    %58 = vector.broadcast %57 : vector<16x1xf32> to vector<16x16xf32>
    %59 = arith.subf %55, %58 : vector<16x16xf32>
    %60 = math.exp %59 : vector<16x16xf32>
    %cst_33 = arith.constant dense<0.000000e+00> : vector<16xf32>
    %61 = vector.multi_reduction <add>, %60, %cst_33 [1] : vector<16x16xf32> to vector<16xf32>
    %62 = vector.shape_cast %61 : vector<16xf32> to vector<16x1xf32>
    %63 = tpu.reciprocal %62 {approx = true} : vector<16x1xf32> -> vector<16x1xf32>
    %64 = vector.broadcast %63 : vector<16x1xf32> to vector<16x16xf32>
    %65 = arith.mulf %60, %64 : vector<16x16xf32>
    %cst_34 = arith.constant dense<0.000000e+00> : vector<16x32xf32>
    %66 = tpu.matmul %65, %53, %cst_34 {dimension_numbers = #tpu.dot_dimension_numbers<[1], [0], [0], [1], [0, 0, 1, 1], [], []>} : vector<16x16xf32>, vector<16x32xf32>, vector<16x32xf32> -> vector<16x32xf32>
    %67 = vector.extract_strided_slice %21 {offsets = [0, 0], sizes = [32, 64], strides = [1, 1]} : vector<64x64xf32> to vector<32x64xf32>
    %cst_35 = arith.constant dense<0.000000e+00> : vector<16x64xf32>
    %68 = tpu.matmul %66, %67, %cst_35 {dimension_numbers = #tpu.dot_dimension_numbers<[1], [0], [0], [1], [0, 0, 1, 1], [], []>} : vector<16x32xf32>, vector<32x64xf32>, vector<16x64xf32> -> vector<16x64xf32>
    %69 = vector.extract_strided_slice %50 {offsets = [0, 32], sizes = [16, 32], strides = [1, 1]} : vector<16x192xf32> to vector<16x32xf32>
    %70 = vector.extract_strided_slice %50 {offsets = [0, 96], sizes = [16, 32], strides = [1, 1]} : vector<16x192xf32> to vector<16x32xf32>
    %71 = vector.extract_strided_slice %50 {offsets = [0, 160], sizes = [16, 32], strides = [1, 1]} : vector<16x192xf32> to vector<16x32xf32>
    %cst_36 = arith.constant dense<0.000000e+00> : vector<16x16xf32>
    %72 = tpu.matmul %69, %70, %cst_36 {dimension_numbers = #tpu.dot_dimension_numbers<[1], [1], [0], [0], [0, 0, 1, 0], [], []>} : vector<16x32xf32>, vector<16x32xf32>, vector<16x16xf32> -> vector<16x16xf32>
    %73 = arith.addf %72, %7 : vector<16x16xf32>
    %cst_37 = arith.constant dense<0xFF800000> : vector<16xf32>
    %74 = vector.multi_reduction <maximumf>, %73, %cst_37 [1] : vector<16x16xf32> to vector<16xf32>
    %75 = vector.shape_cast %74 : vector<16xf32> to vector<16x1xf32>
    %76 = vector.broadcast %75 : vector<16x1xf32> to vector<16x16xf32>
    %77 = arith.subf %73, %76 : vector<16x16xf32>
    %78 = math.exp %77 : vector<16x16xf32>
    %cst_38 = arith.constant dense<0.000000e+00> : vector<16xf32>
    %79 = vector.multi_reduction <add>, %78, %cst_38 [1] : vector<16x16xf32> to vector<16xf32>
    %80 = vector.shape_cast %79 : vector<16xf32> to vector<16x1xf32>
    %81 = tpu.reciprocal %80 {approx = true} : vector<16x1xf32> -> vector<16x1xf32>
    %82 = vector.broadcast %81 : vector<16x1xf32> to vector<16x16xf32>
    %83 = arith.mulf %78, %82 : vector<16x16xf32>
    %cst_39 = arith.constant dense<0.000000e+00> : vector<16x32xf32>
    %84 = tpu.matmul %83, %71, %cst_39 {dimension_numbers = #tpu.dot_dimension_numbers<[1], [0], [0], [1], [0, 0, 1, 1], [], []>} : vector<16x16xf32>, vector<16x32xf32>, vector<16x32xf32> -> vector<16x32xf32>
    %85 = vector.extract_strided_slice %21 {offsets = [32, 0], sizes = [32, 64], strides = [1, 1]} : vector<64x64xf32> to vector<32x64xf32>
    %cst_40 = arith.constant dense<0.000000e+00> : vector<16x64xf32>
    %86 = tpu.matmul %84, %85, %cst_40 {dimension_numbers = #tpu.dot_dimension_numbers<[1], [0], [0], [1], [0, 0, 1, 1], [], []>} : vector<16x32xf32>, vector<32x64xf32>, vector<16x64xf32> -> vector<16x64xf32>
    %87 = arith.addf %68, %86 : vector<16x64xf32>
    %88 = arith.addf %6, %87 : vector<16x64xf32>
    %89 = vector.broadcast %13 : vector<1x64xf32> to vector<16x64xf32>
    %90 = arith.addf %88, %89 : vector<16x64xf32>
    %cst_41 = arith.constant dense<0.000000e+00> : vector<16xf32>
    %91 = vector.multi_reduction <add>, %90, %cst_41 [1] : vector<16x64xf32> to vector<16xf32>
    %92 = vector.shape_cast %91 : vector<16xf32> to vector<16x1xf32>
    %cst_42 = arith.constant 6.400000e+01 : f32
    %93 = vector.broadcast %cst_42 : f32 to vector<16x1xf32>
    %94 = arith.divf %92, %93 : vector<16x1xf32>
    %95 = vector.broadcast %94 : vector<16x1xf32> to vector<16x64xf32>
    %96 = arith.subf %90, %95 : vector<16x64xf32>
    %97 = arith.mulf %96, %96 : vector<16x64xf32>
    %cst_43 = arith.constant dense<0.000000e+00> : vector<16xf32>
    %98 = vector.multi_reduction <add>, %97, %cst_43 [1] : vector<16x64xf32> to vector<16xf32>
    %99 = vector.shape_cast %98 : vector<16xf32> to vector<16x1xf32>
    %cst_44 = arith.constant 6.400000e+01 : f32
    %100 = vector.broadcast %cst_44 : f32 to vector<16x1xf32>
    %101 = arith.divf %99, %100 : vector<16x1xf32>
    %102 = vector.broadcast %94 : vector<16x1xf32> to vector<16x64xf32>
    %103 = arith.subf %90, %102 : vector<16x64xf32>
    %cst_45 = arith.constant 9.99999996E-13 : f32
    %104 = vector.broadcast %cst_45 : f32 to vector<16x1xf32>
    %105 = arith.addf %101, %104 : vector<16x1xf32>
    %106 = math.rsqrt %105 : vector<16x1xf32>
    %107 = vector.broadcast %106 : vector<16x1xf32> to vector<16x64xf32>
    %108 = arith.mulf %103, %107 : vector<16x64xf32>
    %109 = vector.broadcast %14 : vector<1x64xf32> to vector<16x64xf32>
    %110 = arith.mulf %108, %109 : vector<16x64xf32>
    %111 = vector.broadcast %15 : vector<1x64xf32> to vector<16x64xf32>
    %112 = arith.addf %110, %111 : vector<16x64xf32>
    %cst_46 = arith.constant dense<0.000000e+00> : vector<16x128xf32>
    %113 = tpu.matmul %112, %23, %cst_46 {dimension_numbers = #tpu.dot_dimension_numbers<[1], [0], [0], [1], [0, 0, 1, 1], [], []>} : vector<16x64xf32>, vector<64x128xf32>, vector<16x128xf32> -> vector<16x128xf32>
    %114 = vector.broadcast %16 : vector<1x128xf32> to vector<16x128xf32>
    %115 = arith.addf %113, %114 : vector<16x128xf32>
    %116 = arith.mulf %115, %115 : vector<16x128xf32>
    %117 = arith.mulf %115, %116 : vector<16x128xf32>
    %cst_47 = arith.constant 4.471500e-02 : f32
    %118 = vector.broadcast %cst_47 : f32 to vector<16x128xf32>
    %119 = arith.mulf %118, %117 : vector<16x128xf32>
    %120 = arith.addf %115, %119 : vector<16x128xf32>
    %cst_48 = arith.constant 0.797884583 : f32
    %121 = vector.broadcast %cst_48 : f32 to vector<16x128xf32>
    %122 = arith.mulf %121, %120 : vector<16x128xf32>
    %123 = math.tanh %122 : vector<16x128xf32>
    %cst_49 = arith.constant 1.000000e+00 : f32
    %124 = vector.broadcast %cst_49 : f32 to vector<16x128xf32>
    %125 = arith.addf %124, %123 : vector<16x128xf32>
    %cst_50 = arith.constant 5.000000e-01 : f32
    %126 = vector.broadcast %cst_50 : f32 to vector<16x128xf32>
    %127 = arith.mulf %126, %125 : vector<16x128xf32>
    %128 = arith.mulf %115, %127 : vector<16x128xf32>
    %cst_51 = arith.constant dense<0.000000e+00> : vector<16x64xf32>
    %129 = tpu.matmul %128, %25, %cst_51 {dimension_numbers = #tpu.dot_dimension_numbers<[1], [0], [0], [1], [0, 0, 1, 1], [], []>} : vector<16x128xf32>, vector<128x64xf32>, vector<16x64xf32> -> vector<16x64xf32>
    %130 = arith.addf %90, %129 : vector<16x64xf32>
    %131 = vector.broadcast %17 : vector<1x64xf32> to vector<16x64xf32>
    %132 = arith.addf %130, %131 : vector<16x64xf32>
    %c1 = arith.constant 1 : index
    %c0_52 = arith.constant 0 : index
    %c0_53 = arith.constant 0 : index
    %133 = vector.load %arg10[%c1, %c0_52, %c0_53] : memref<2x8x192xf32, #tpu.memory_space<vmem>>, vector<1x8x192xf32>
    %134 = vector.shape_cast %133 : vector<1x8x192xf32> to vector<8x192xf32>
    %135 = vector.extract_strided_slice %134 {offsets = [0, 0], sizes = [1, 64], strides = [1, 1]} : vector<8x192xf32> to vector<1x64xf32>
    %136 = vector.extract_strided_slice %134 {offsets = [1, 0], sizes = [1, 64], strides = [1, 1]} : vector<8x192xf32> to vector<1x64xf32>
    %137 = vector.extract_strided_slice %134 {offsets = [2, 0], sizes = [1, 192], strides = [1, 1]} : vector<8x192xf32> to vector<1x192xf32>
    %138 = vector.extract_strided_slice %134 {offsets = [3, 0], sizes = [1, 64], strides = [1, 1]} : vector<8x192xf32> to vector<1x64xf32>
    %139 = vector.extract_strided_slice %134 {offsets = [4, 0], sizes = [1, 64], strides = [1, 1]} : vector<8x192xf32> to vector<1x64xf32>
    %140 = vector.extract_strided_slice %134 {offsets = [5, 0], sizes = [1, 64], strides = [1, 1]} : vector<8x192xf32> to vector<1x64xf32>
    %141 = vector.extract_strided_slice %134 {offsets = [6, 0], sizes = [1, 128], strides = [1, 1]} : vector<8x192xf32> to vector<1x128xf32>
    %142 = vector.extract_strided_slice %134 {offsets = [7, 0], sizes = [1, 64], strides = [1, 1]} : vector<8x192xf32> to vector<1x64xf32>
    %c1_54 = arith.constant 1 : index
    %c0_55 = arith.constant 0 : index
    %c0_56 = arith.constant 0 : index
    %143 = vector.load %arg6[%c1_54, %c0_55, %c0_56] : memref<2x64x192xf32, #tpu.memory_space<vmem>>, vector<1x64x192xf32>
    %144 = vector.shape_cast %143 : vector<1x64x192xf32> to vector<64x192xf32>
    %c1_57 = arith.constant 1 : index
    %c0_58 = arith.constant 0 : index
    %c0_59 = arith.constant 0 : index
    %145 = vector.load %arg7[%c1_57, %c0_58, %c0_59] : memref<2x64x64xf32, #tpu.memory_space<vmem>>, vector<1x64x64xf32>
    %146 = vector.shape_cast %145 : vector<1x64x64xf32> to vector<64x64xf32>
    %c1_60 = arith.constant 1 : index
    %c0_61 = arith.constant 0 : index
    %c0_62 = arith.constant 0 : index
    %147 = vector.load %arg8[%c1_60, %c0_61, %c0_62] : memref<2x64x128xf32, #tpu.memory_space<vmem>>, vector<1x64x128xf32>
    %148 = vector.shape_cast %147 : vector<1x64x128xf32> to vector<64x128xf32>
    %c1_63 = arith.constant 1 : index
    %c0_64 = arith.constant 0 : index
    %c0_65 = arith.constant 0 : index
    %149 = vector.load %arg9[%c1_63, %c0_64, %c0_65] : memref<2x128x64xf32, #tpu.memory_space<vmem>>, vector<1x128x64xf32>
    %150 = vector.shape_cast %149 : vector<1x128x64xf32> to vector<128x64xf32>
    %cst_66 = arith.constant dense<0.000000e+00> : vector<16xf32>
    %151 = vector.multi_reduction <add>, %132, %cst_66 [1] : vector<16x64xf32> to vector<16xf32>
    %152 = vector.shape_cast %151 : vector<16xf32> to vector<16x1xf32>
    %cst_67 = arith.constant 6.400000e+01 : f32
    %153 = vector.broadcast %cst_67 : f32 to vector<16x1xf32>
    %154 = arith.divf %152, %153 : vector<16x1xf32>
    %155 = vector.broadcast %154 : vector<16x1xf32> to vector<16x64xf32>
    %156 = arith.subf %132, %155 : vector<16x64xf32>
    %157 = arith.mulf %156, %156 : vector<16x64xf32>
    %cst_68 = arith.constant dense<0.000000e+00> : vector<16xf32>
    %158 = vector.multi_reduction <add>, %157, %cst_68 [1] : vector<16x64xf32> to vector<16xf32>
    %159 = vector.shape_cast %158 : vector<16xf32> to vector<16x1xf32>
    %cst_69 = arith.constant 6.400000e+01 : f32
    %160 = vector.broadcast %cst_69 : f32 to vector<16x1xf32>
    %161 = arith.divf %159, %160 : vector<16x1xf32>
    %162 = vector.broadcast %154 : vector<16x1xf32> to vector<16x64xf32>
    %163 = arith.subf %132, %162 : vector<16x64xf32>
    %cst_70 = arith.constant 9.99999996E-13 : f32
    %164 = vector.broadcast %cst_70 : f32 to vector<16x1xf32>
    %165 = arith.addf %161, %164 : vector<16x1xf32>
    %166 = math.rsqrt %165 : vector<16x1xf32>
    %167 = vector.broadcast %166 : vector<16x1xf32> to vector<16x64xf32>
    %168 = arith.mulf %163, %167 : vector<16x64xf32>
    %169 = vector.broadcast %135 : vector<1x64xf32> to vector<16x64xf32>
    %170 = arith.mulf %168, %169 : vector<16x64xf32>
    %171 = vector.broadcast %136 : vector<1x64xf32> to vector<16x64xf32>
    %172 = arith.addf %170, %171 : vector<16x64xf32>
    %cst_71 = arith.constant dense<0.000000e+00> : vector<16x192xf32>
    %173 = tpu.matmul %172, %144, %cst_71 {dimension_numbers = #tpu.dot_dimension_numbers<[1], [0], [0], [1], [0, 0, 1, 1], [], []>} : vector<16x64xf32>, vector<64x192xf32>, vector<16x192xf32> -> vector<16x192xf32>
    %174 = vector.broadcast %137 : vector<1x192xf32> to vector<16x192xf32>
    %175 = arith.addf %173, %174 : vector<16x192xf32>
    %176 = vector.extract_strided_slice %175 {offsets = [0, 0], sizes = [16, 32], strides = [1, 1]} : vector<16x192xf32> to vector<16x32xf32>
    %177 = vector.extract_strided_slice %175 {offsets = [0, 64], sizes = [16, 32], strides = [1, 1]} : vector<16x192xf32> to vector<16x32xf32>
    %178 = vector.extract_strided_slice %175 {offsets = [0, 128], sizes = [16, 32], strides = [1, 1]} : vector<16x192xf32> to vector<16x32xf32>
    %cst_72 = arith.constant dense<0.000000e+00> : vector<16x16xf32>
    %179 = tpu.matmul %176, %177, %cst_72 {dimension_numbers = #tpu.dot_dimension_numbers<[1], [1], [0], [0], [0, 0, 1, 0], [], []>} : vector<16x32xf32>, vector<16x32xf32>, vector<16x16xf32> -> vector<16x16xf32>
    %180 = arith.addf %179, %7 : vector<16x16xf32>
    %cst_73 = arith.constant dense<0xFF800000> : vector<16xf32>
    %181 = vector.multi_reduction <maximumf>, %180, %cst_73 [1] : vector<16x16xf32> to vector<16xf32>
    %182 = vector.shape_cast %181 : vector<16xf32> to vector<16x1xf32>
    %183 = vector.broadcast %182 : vector<16x1xf32> to vector<16x16xf32>
    %184 = arith.subf %180, %183 : vector<16x16xf32>
    %185 = math.exp %184 : vector<16x16xf32>
    %cst_74 = arith.constant dense<0.000000e+00> : vector<16xf32>
    %186 = vector.multi_reduction <add>, %185, %cst_74 [1] : vector<16x16xf32> to vector<16xf32>
    %187 = vector.shape_cast %186 : vector<16xf32> to vector<16x1xf32>
    %188 = tpu.reciprocal %187 {approx = true} : vector<16x1xf32> -> vector<16x1xf32>
    %189 = vector.broadcast %188 : vector<16x1xf32> to vector<16x16xf32>
    %190 = arith.mulf %185, %189 : vector<16x16xf32>
    %cst_75 = arith.constant dense<0.000000e+00> : vector<16x32xf32>
    %191 = tpu.matmul %190, %178, %cst_75 {dimension_numbers = #tpu.dot_dimension_numbers<[1], [0], [0], [1], [0, 0, 1, 1], [], []>} : vector<16x16xf32>, vector<16x32xf32>, vector<16x32xf32> -> vector<16x32xf32>
    %192 = vector.extract_strided_slice %146 {offsets = [0, 0], sizes = [32, 64], strides = [1, 1]} : vector<64x64xf32> to vector<32x64xf32>
    %cst_76 = arith.constant dense<0.000000e+00> : vector<16x64xf32>
    %193 = tpu.matmul %191, %192, %cst_76 {dimension_numbers = #tpu.dot_dimension_numbers<[1], [0], [0], [1], [0, 0, 1, 1], [], []>} : vector<16x32xf32>, vector<32x64xf32>, vector<16x64xf32> -> vector<16x64xf32>
    %194 = vector.extract_strided_slice %175 {offsets = [0, 32], sizes = [16, 32], strides = [1, 1]} : vector<16x192xf32> to vector<16x32xf32>
    %195 = vector.extract_strided_slice %175 {offsets = [0, 96], sizes = [16, 32], strides = [1, 1]} : vector<16x192xf32> to vector<16x32xf32>
    %196 = vector.extract_strided_slice %175 {offsets = [0, 160], sizes = [16, 32], strides = [1, 1]} : vector<16x192xf32> to vector<16x32xf32>
    %cst_77 = arith.constant dense<0.000000e+00> : vector<16x16xf32>
    %197 = tpu.matmul %194, %195, %cst_77 {dimension_numbers = #tpu.dot_dimension_numbers<[1], [1], [0], [0], [0, 0, 1, 0], [], []>} : vector<16x32xf32>, vector<16x32xf32>, vector<16x16xf32> -> vector<16x16xf32>
    %198 = arith.addf %197, %7 : vector<16x16xf32>
    %cst_78 = arith.constant dense<0xFF800000> : vector<16xf32>
    %199 = vector.multi_reduction <maximumf>, %198, %cst_78 [1] : vector<16x16xf32> to vector<16xf32>
    %200 = vector.shape_cast %199 : vector<16xf32> to vector<16x1xf32>
    %201 = vector.broadcast %200 : vector<16x1xf32> to vector<16x16xf32>
    %202 = arith.subf %198, %201 : vector<16x16xf32>
    %203 = math.exp %202 : vector<16x16xf32>
    %cst_79 = arith.constant dense<0.000000e+00> : vector<16xf32>
    %204 = vector.multi_reduction <add>, %203, %cst_79 [1] : vector<16x16xf32> to vector<16xf32>
    %205 = vector.shape_cast %204 : vector<16xf32> to vector<16x1xf32>
    %206 = tpu.reciprocal %205 {approx = true} : vector<16x1xf32> -> vector<16x1xf32>
    %207 = vector.broadcast %206 : vector<16x1xf32> to vector<16x16xf32>
    %208 = arith.mulf %203, %207 : vector<16x16xf32>
    %cst_80 = arith.constant dense<0.000000e+00> : vector<16x32xf32>
    %209 = tpu.matmul %208, %196, %cst_80 {dimension_numbers = #tpu.dot_dimension_numbers<[1], [0], [0], [1], [0, 0, 1, 1], [], []>} : vector<16x16xf32>, vector<16x32xf32>, vector<16x32xf32> -> vector<16x32xf32>
    %210 = vector.extract_strided_slice %146 {offsets = [32, 0], sizes = [32, 64], strides = [1, 1]} : vector<64x64xf32> to vector<32x64xf32>
    %cst_81 = arith.constant dense<0.000000e+00> : vector<16x64xf32>
    %211 = tpu.matmul %209, %210, %cst_81 {dimension_numbers = #tpu.dot_dimension_numbers<[1], [0], [0], [1], [0, 0, 1, 1], [], []>} : vector<16x32xf32>, vector<32x64xf32>, vector<16x64xf32> -> vector<16x64xf32>
    %212 = arith.addf %193, %211 : vector<16x64xf32>
    %213 = arith.addf %132, %212 : vector<16x64xf32>
    %214 = vector.broadcast %138 : vector<1x64xf32> to vector<16x64xf32>
    %215 = arith.addf %213, %214 : vector<16x64xf32>
    %cst_82 = arith.constant dense<0.000000e+00> : vector<16xf32>
    %216 = vector.multi_reduction <add>, %215, %cst_82 [1] : vector<16x64xf32> to vector<16xf32>
    %217 = vector.shape_cast %216 : vector<16xf32> to vector<16x1xf32>
    %cst_83 = arith.constant 6.400000e+01 : f32
    %218 = vector.broadcast %cst_83 : f32 to vector<16x1xf32>
    %219 = arith.divf %217, %218 : vector<16x1xf32>
    %220 = vector.broadcast %219 : vector<16x1xf32> to vector<16x64xf32>
    %221 = arith.subf %215, %220 : vector<16x64xf32>
    %222 = arith.mulf %221, %221 : vector<16x64xf32>
    %cst_84 = arith.constant dense<0.000000e+00> : vector<16xf32>
    %223 = vector.multi_reduction <add>, %222, %cst_84 [1] : vector<16x64xf32> to vector<16xf32>
    %224 = vector.shape_cast %223 : vector<16xf32> to vector<16x1xf32>
    %cst_85 = arith.constant 6.400000e+01 : f32
    %225 = vector.broadcast %cst_85 : f32 to vector<16x1xf32>
    %226 = arith.divf %224, %225 : vector<16x1xf32>
    %227 = vector.broadcast %219 : vector<16x1xf32> to vector<16x64xf32>
    %228 = arith.subf %215, %227 : vector<16x64xf32>
    %cst_86 = arith.constant 9.99999996E-13 : f32
    %229 = vector.broadcast %cst_86 : f32 to vector<16x1xf32>
    %230 = arith.addf %226, %229 : vector<16x1xf32>
    %231 = math.rsqrt %230 : vector<16x1xf32>
    %232 = vector.broadcast %231 : vector<16x1xf32> to vector<16x64xf32>
    %233 = arith.mulf %228, %232 : vector<16x64xf32>
    %234 = vector.broadcast %139 : vector<1x64xf32> to vector<16x64xf32>
    %235 = arith.mulf %233, %234 : vector<16x64xf32>
    %236 = vector.broadcast %140 : vector<1x64xf32> to vector<16x64xf32>
    %237 = arith.addf %235, %236 : vector<16x64xf32>
    %cst_87 = arith.constant dense<0.000000e+00> : vector<16x128xf32>
    %238 = tpu.matmul %237, %148, %cst_87 {dimension_numbers = #tpu.dot_dimension_numbers<[1], [0], [0], [1], [0, 0, 1, 1], [], []>} : vector<16x64xf32>, vector<64x128xf32>, vector<16x128xf32> -> vector<16x128xf32>
    %239 = vector.broadcast %141 : vector<1x128xf32> to vector<16x128xf32>
    %240 = arith.addf %238, %239 : vector<16x128xf32>
    %241 = arith.mulf %240, %240 : vector<16x128xf32>
    %242 = arith.mulf %240, %241 : vector<16x128xf32>
    %cst_88 = arith.constant 4.471500e-02 : f32
    %243 = vector.broadcast %cst_88 : f32 to vector<16x128xf32>
    %244 = arith.mulf %243, %242 : vector<16x128xf32>
    %245 = arith.addf %240, %244 : vector<16x128xf32>
    %cst_89 = arith.constant 0.797884583 : f32
    %246 = vector.broadcast %cst_89 : f32 to vector<16x128xf32>
    %247 = arith.mulf %246, %245 : vector<16x128xf32>
    %248 = math.tanh %247 : vector<16x128xf32>
    %cst_90 = arith.constant 1.000000e+00 : f32
    %249 = vector.broadcast %cst_90 : f32 to vector<16x128xf32>
    %250 = arith.addf %249, %248 : vector<16x128xf32>
    %cst_91 = arith.constant 5.000000e-01 : f32
    %251 = vector.broadcast %cst_91 : f32 to vector<16x128xf32>
    %252 = arith.mulf %251, %250 : vector<16x128xf32>
    %253 = arith.mulf %240, %252 : vector<16x128xf32>
    %cst_92 = arith.constant dense<0.000000e+00> : vector<16x64xf32>
    %254 = tpu.matmul %253, %150, %cst_92 {dimension_numbers = #tpu.dot_dimension_numbers<[1], [0], [0], [1], [0, 0, 1, 1], [], []>} : vector<16x128xf32>, vector<128x64xf32>, vector<16x64xf32> -> vector<16x64xf32>
    %255 = arith.addf %215, %254 : vector<16x64xf32>
    %256 = vector.broadcast %142 : vector<1x64xf32> to vector<16x64xf32>
    %257 = arith.addf %255, %256 : vector<16x64xf32>
    %c0_93 = arith.constant 0 : index
    %c0_94 = arith.constant 0 : index
    %258 = vector.load %arg5[%c0_93, %c0_94] : memref<2x16xf32, #tpu.memory_space<vmem>>, vector<2x16xf32>
    %cst_95 = arith.constant dense<0.000000e+00> : vector<2x64xf32>
    %259 = tpu.matmul %258, %257, %cst_95 {dimension_numbers = #tpu.dot_dimension_numbers<[1], [0], [0], [1], [0, 0, 1, 1], [], []>} : vector<2x16xf32>, vector<16x64xf32>, vector<2x64xf32> -> vector<2x64xf32>
    %c0_96 = arith.constant 0 : index
    %c0_97 = arith.constant 0 : index
    %260 = vector.load %arg11[%c0_96, %c0_97] : memref<2x64xf32, #tpu.memory_space<vmem>>, vector<2x64xf32>
    tpu.vector_store %arg11[%c0_96, %c0_97], %259 {strides = array<i32>} : memref<2x64xf32, #tpu.memory_space<vmem>>, vector<2x64xf32>,
    return
  }
}

</mosaic_0001>

<llo_original>
// kernel: tpu_custom_call.1
$region0: #{tpu_custom_call.1}
  #allocation0 [shape = 'u32[]', space=smem, size = 0x4, offset = 0x4, fixed_abs, tag = 'smem constant byte address 0x4 - core index']
  #allocation1 [shape = 'u32[72,128]{1,0:T(1,128)}', space=vmem, size = 0x9000, scoped, tag = 'internal scratch']
  %s0 = inlined_call_operand.vmem [shape: f32[8,768], index: 0, kind: input, shape index: {}]
  %s1 = inlined_call_operand.vmem [shape: f32[768,64], index: 1, kind: input, shape index: {}]
  %s2 = inlined_call_operand.vmem [shape: f32[16,8], index: 2, kind: input, shape index: {}]
  %s3 = inlined_call_operand.vmem [shape: f32[16,64], index: 3, kind: input, shape index: {}]
  %s4 = inlined_call_operand.vmem [shape: f32[16,16], index: 4, kind: input, shape index: {}]
  %s5 = inlined_call_operand.vmem [shape: f32[2,16], index: 5, kind: input, shape index: {}]
  %s6 = inlined_call_operand.vmem [shape: f32[2,64,192], index: 6, kind: input, shape index: {}]
  %s7 = inlined_call_operand.vmem [shape: f32[2,64,64], index: 7, kind: input, shape index: {}]
  %s8 = inlined_call_operand.vmem [shape: f32[2,64,128], index: 8, kind: input, shape index: {}]
  %s9 = inlined_call_operand.vmem [shape: f32[2,128,64], index: 9, kind: input, shape index: {}]
  %s10 = inlined_call_operand.vmem [shape: f32[2,8,192], index: 10, kind: input, shape index: {}]
  %s11 = inlined_call_operand.hbm [shape: f32[2,64], index: 11, kind: output, shape index: {}]
  %s12 = sld [smem:[#allocation0]]
  $region54: #{tpu_custom_call.1} parent=0
    _
  %s14 = ssub.s32 1, %s12
  %s15 = scalar_select 0, %s14, %s12
  $region1: #{tpu_custom_call.1} parent=0
    #allocation2 [shape = 'u8[1024]{0}', space=vmem, size = 0x400, scoped, tag = 'output window, operand 0, single buffered']
    #allocation3 [shape = 's32[1]{0}', space=sflag, size = 0x4, scoped, tag = 'scoped memory for tpu_custom_call.1']
    %16 = vsyncpa [#allocation3], 0
    // Predicated region
    $region2: #{tpu_custom_call.1} parent=1 // pred_check
      _
    $region3: #{tpu_custom_call.1} parent=1 // pred_check_branch
      %18 = sbr.rel (0) target = $region5
    $region4: #{tpu_custom_call.1} parent=1 // pred_region
      _
    $region5: #{tpu_custom_call.1} parent=1 // pred_fallthru
      _
    // Predicated region
    $region6: #{tpu_custom_call.1} parent=1 // pred_check
      _
    $region7: #{tpu_custom_call.1} parent=1 // pred_check_branch
      %20 = sbr.rel (0) target = $region9
    $region8: #{tpu_custom_call.1} parent=1 // pred_region
      _
    $region9: #{tpu_custom_call.1} parent=1 // pred_fallthru
      _
    // Predicated region
    $region10: #{tpu_custom_call.1} parent=1 // pred_check
      _
    $region11: #{tpu_custom_call.1} parent=1 // pred_check_branch
      %22 = sbr.rel (0) target = $region13
    $region12: #{tpu_custom_call.1} parent=1 // pred_region
      _
    $region13: #{tpu_custom_call.1} parent=1 // pred_fallthru
      _
    // Predicated region
    $region14: #{tpu_custom_call.1} parent=1 // pred_check
      _
    $region15: #{tpu_custom_call.1} parent=1 // pred_check_branch
      %24 = sbr.rel (0) target = $region17
    $region16: #{tpu_custom_call.1} parent=1 // pred_region
      _
    $region17: #{tpu_custom_call.1} parent=1 // pred_fallthru
      _
    // Predicated region
    $region18: #{tpu_custom_call.1} parent=1 // pred_check
      _
    $region19: #{tpu_custom_call.1} parent=1 // pred_check_branch
      %26 = sbr.rel (0) target = $region21
    $region20: #{tpu_custom_call.1} parent=1 // pred_region
      _
    $region21: #{tpu_custom_call.1} parent=1 // pred_fallthru
      _
    // Predicated region
    $region22: #{tpu_custom_call.1} parent=1 // pred_check
      _
    $region23: #{tpu_custom_call.1} parent=1 // pred_check_branch
      %28 = sbr.rel (0) target = $region25
    $region24: #{tpu_custom_call.1} parent=1 // pred_region
      _
    $region25: #{tpu_custom_call.1} parent=1 // pred_fallthru
      _
    // Predicated region
    $region26: #{tpu_custom_call.1} parent=1 // pred_check
      _
    $region27: #{tpu_custom_call.1} parent=1 // pred_check_branch
      %30 = sbr.rel (0) target = $region29
    $region28: #{tpu_custom_call.1} parent=1 // pred_region
      _
    $region29: #{tpu_custom_call.1} parent=1 // pred_fallthru
      _
    // Predicated region
    $region30: #{tpu_custom_call.1} parent=1 // pred_check
      _
    $region31: #{tpu_custom_call.1} parent=1 // pred_check_branch
      %32 = sbr.rel (0) target = $region33
    $region32: #{tpu_custom_call.1} parent=1 // pred_region
      _
    $region33: #{tpu_custom_call.1} parent=1 // pred_fallthru
      _
    // Predicated region
    $region34: #{tpu_custom_call.1} parent=1 // pred_check
      _
    $region35: #{tpu_custom_call.1} parent=1 // pred_check_branch
      %34 = sbr.rel (0) target = $region37
    $region36: #{tpu_custom_call.1} parent=1 // pred_region
      _
    $region37: #{tpu_custom_call.1} parent=1 // pred_fallthru
      _
    // Predicated region
    $region38: #{tpu_custom_call.1} parent=1 // pred_check
      _
    $region39: #{tpu_custom_call.1} parent=1 // pred_check_branch
      %36 = sbr.rel (0) target = $region41
    $region40: #{tpu_custom_call.1} parent=1 // pred_region
      _
    $region41: #{tpu_custom_call.1} parent=1 // pred_fallthru
      _
    // Predicated region
    $region42: #{tpu_custom_call.1} parent=1 // pred_check
      _
    $region43: #{tpu_custom_call.1} parent=1 // pred_check_branch
      %38 = sbr.rel (0) target = $region45
    $region44: #{tpu_custom_call.1} parent=1 // pred_region
      _
    $region45: #{tpu_custom_call.1} parent=1 // pred_fallthru
      _
    %v39 = vld [vmem:[%s0] sm:$0xff]
    %v40 = vld [vmem:[%s0 + $0x8] sm:$0xff]
    %v41 = vld [vmem:[%s0 + $0x10] sm:$0xff]
    %v42 = vld [vmem:[%s0 + $0x18] sm:$0xff]
    %v43 = vld [vmem:[%s0 + $0x20] sm:$0xff]
    %v44 = vld [vmem:[%s0 + $0x28] sm:$0xff]
    %v45 = vld [vmem:[%s1] sm:$0xff]
    %v46 = vld [vmem:[%s1 + $0x8] sm:$0xff]
    %v47 = vld [vmem:[%s1 + $0x10] sm:$0xff]
    %v48 = vld [vmem:[%s1 + $0x18] sm:$0xff]
    %v49 = vld [vmem:[%s1 + $0x20] sm:$0xff]
    %v50 = vld [vmem:[%s1 + $0x28] sm:$0xff]
    %v51 = vld [vmem:[%s1 + $0x30] sm:$0xff]
    %v52 = vld [vmem:[%s1 + $0x38] sm:$0xff]
    %v53 = vld [vmem:[%s1 + $0x40] sm:$0xff]
    %v54 = vld [vmem:[%s1 + $0x48] sm:$0xff]
    %v55 = vld [vmem:[%s1 + $0x50] sm:$0xff]
    %v56 = vld [vmem:[%s1 + $0x58] sm:$0xff]
    %v57 = vld [vmem:[%s1 + $0x60] sm:$0xff]
    %v58 = vld [vmem:[%s1 + $0x68] sm:$0xff]
    %v59 = vld [vmem:[%s1 + $0x70] sm:$0xff]
    %v60 = vld [vmem:[%s1 + $0x78] sm:$0xff]
    %v61 = vld [vmem:[%s1 + $0x80] sm:$0xff]
    %v62 = vld [vmem:[%s1 + $0x88] sm:$0xff]
    %v63 = vld [vmem:[%s1 + $0x90] sm:$0xff]
    %v64 = vld [vmem:[%s1 + $0x98] sm:$0xff]
    %v65 = vld [vmem:[%s1 + $0xa0] sm:$0xff]
    %v66 = vld [vmem:[%s1 + $0xa8] sm:$0xff]
    %v67 = vld [vmem:[%s1 + $0xb0] sm:$0xff]
    %v68 = vld [vmem:[%s1 + $0xb8] sm:$0xff]
    %v69 = vld [vmem:[%s1 + $0xc0] sm:$0xff]
    %v70 = vld [vmem:[%s1 + $0xc8] sm:$0xff]
    %v71 = vld [vmem:[%s1 + $0xd0] sm:$0xff]
    %v72 = vld [vmem:[%s1 + $0xd8] sm:$0xff]
    %v73 = vld [vmem:[%s1 + $0xe0] sm:$0xff]
    %v74 = vld [vmem:[%s1 + $0xe8] sm:$0xff]
    %v75 = vld [vmem:[%s1 + $0xf0] sm:$0xff]
    %v76 = vld [vmem:[%s1 + $0xf8] sm:$0xff]
    %v77 = vld [vmem:[%s1 + $0x100] sm:$0xff]
    %v78 = vld [vmem:[%s1 + $0x108] sm:$0xff]
    %v79 = vld [vmem:[%s1 + $0x110] sm:$0xff]
    %v80 = vld [vmem:[%s1 + $0x118] sm:$0xff]
    %v81 = vld [vmem:[%s1 + $0x120] sm:$0xff]
    %v82 = vld [vmem:[%s1 + $0x128] sm:$0xff]
    %v83 = vld [vmem:[%s1 + $0x130] sm:$0xff]
    %v84 = vld [vmem:[%s1 + $0x138] sm:$0xff]
    %v85 = vld [vmem:[%s1 + $0x140] sm:$0xff]
    %v86 = vld [vmem:[%s1 + $0x148] sm:$0xff]
    %v87 = vld [vmem:[%s1 + $0x150] sm:$0xff]
    %v88 = vld [vmem:[%s1 + $0x158] sm:$0xff]
    %v89 = vld [vmem:[%s1 + $0x160] sm:$0xff]
    %v90 = vld [vmem:[%s1 + $0x168] sm:$0xff]
    %v91 = vld [vmem:[%s1 + $0x170] sm:$0xff]
    %v92 = vld [vmem:[%s1 + $0x178] sm:$0xff]
    %v93 = vld [vmem:[%s1 + $0x180] sm:$0xff]
    %v94 = vld [vmem:[%s1 + $0x188] sm:$0xff]
    %v95 = vld [vmem:[%s1 + $0x190] sm:$0xff]
    %v96 = vld [vmem:[%s1 + $0x198] sm:$0xff]
    %v97 = vld [vmem:[%s1 + $0x1a0] sm:$0xff]
    %v98 = vld [vmem:[%s1 + $0x1a8] sm:$0xff]
    %v99 = vld [vmem:[%s1 + $0x1b0] sm:$0xff]
    %v100 = vld [vmem:[%s1 + $0x1b8] sm:$0xff]
    %v101 = vld [vmem:[%s1 + $0x1c0] sm:$0xff]
    %v102 = vld [vmem:[%s1 + $0x1c8] sm:$0xff]
    %v103 = vld [vmem:[%s1 + $0x1d0] sm:$0xff]
    %v104 = vld [vmem:[%s1 + $0x1d8] sm:$0xff]
    %v105 = vld [vmem:[%s1 + $0x1e0] sm:$0xff]
    %v106 = vld [vmem:[%s1 + $0x1e8] sm:$0xff]
    %v107 = vld [vmem:[%s1 + $0x1f0] sm:$0xff]
    %v108 = vld [vmem:[%s1 + $0x1f8] sm:$0xff]
    %v109 = vld [vmem:[%s1 + $0x200] sm:$0xff]
    %v110 = vld [vmem:[%s1 + $0x208] sm:$0xff]
    %v111 = vld [vmem:[%s1 + $0x210] sm:$0xff]
    %v112 = vld [vmem:[%s1 + $0x218] sm:$0xff]
    %v113 = vld [vmem:[%s1 + $0x220] sm:$0xff]
    %v114 = vld [vmem:[%s1 + $0x228] sm:$0xff]
    %v115 = vld [vmem:[%s1 + $0x230] sm:$0xff]
    %v116 = vld [vmem:[%s1 + $0x238] sm:$0xff]
    %v117 = vld [vmem:[%s1 + $0x240] sm:$0xff]
    %v118 = vld [vmem:[%s1 + $0x248] sm:$0xff]
    %v119 = vld [vmem:[%s1 + $0x250] sm:$0xff]
    %v120 = vld [vmem:[%s1 + $0x258] sm:$0xff]
    %v121 = vld [vmem:[%s1 + $0x260] sm:$0xff]
    %v122 = vld [vmem:[%s1 + $0x268] sm:$0xff]
    %v123 = vld [vmem:[%s1 + $0x270] sm:$0xff]
    %v124 = vld [vmem:[%s1 + $0x278] sm:$0xff]
    %v125 = vld [vmem:[%s1 + $0x280] sm:$0xff]
    %v126 = vld [vmem:[%s1 + $0x288] sm:$0xff]
    %v127 = vld [vmem:[%s1 + $0x290] sm:$0xff]
    %v128 = vld [vmem:[%s1 + $0x298] sm:$0xff]
    %v129 = vld [vmem:[%s1 + $0x2a0] sm:$0xff]
    %v130 = vld [vmem:[%s1 + $0x2a8] sm:$0xff]
    %v131 = vld [vmem:[%s1 + $0x2b0] sm:$0xff]
    %v132 = vld [vmem:[%s1 + $0x2b8] sm:$0xff]
    %v133 = vld [vmem:[%s1 + $0x2c0] sm:$0xff]
    %v134 = vld [vmem:[%s1 + $0x2c8] sm:$0xff]
    %v135 = vld [vmem:[%s1 + $0x2d0] sm:$0xff]
    %v136 = vld [vmem:[%s1 + $0x2d8] sm:$0xff]
    %v137 = vld [vmem:[%s1 + $0x2e0] sm:$0xff]
    %v138 = vld [vmem:[%s1 + $0x2e8] sm:$0xff]
    %v139 = vld [vmem:[%s1 + $0x2f0] sm:$0xff]
    %v140 = vld [vmem:[%s1 + $0x2f8] sm:$0xff]
    %141 = vmatpush.msra.mxu0 %v60
    %142 = vmatpush.msra.mxu0 %v59
    %143 = vmatpush.msra.mxu0 %v58
    %144 = vmatpush.msra.mxu0 %v57
    %145 = vmatpush.msra.mxu0 %v56
    %146 = vmatpush.msra.mxu0 %v55
    %147 = vmatpush.msra.mxu0 %v54
    %148 = vmatpush.msra.mxu0 %v53
    %149 = vmatpush.msra.mxu0 %v52
    %150 = vmatpush.msra.mxu0 %v51
    %151 = vmatpush.msra.mxu0 %v50
    %152 = vmatpush.msra.mxu0 %v49
    %153 = vmatpush.msra.mxu0 %v48
    %154 = vmatpush.msra.mxu0 %v47
    %155 = vmatpush.msra.mxu0 %v46
    %156 = vmatpush.msra.mxu0 %v45
    %157 = vmatmul.f32.gmra.mxu0 %v39
    %v158 = vpop.f32.mrf.mxu0
    %v159 = vadd.f32 0.0, %v158
    %160 = vdwg.mxu0
    %161 = vmatpush.msra.mxu0 %v76
    %162 = vmatpush.msra.mxu0 %v75
    %163 = vmatpush.msra.mxu0 %v74
    %164 = vmatpush.msra.mxu0 %v73
    %165 = vmatpush.msra.mxu0 %v72
    %166 = vmatpush.msra.mxu0 %v71
    %167 = vmatpush.msra.mxu0 %v70
    %168 = vmatpush.msra.mxu0 %v69
    %169 = vmatpush.msra.mxu0 %v68
    %170 = vmatpush.msra.mxu0 %v67
    %171 = vmatpush.msra.mxu0 %v66
    %172 = vmatpush.msra.mxu0 %v65
    %173 = vmatpush.msra.mxu0 %v64
    %174 = vmatpush.msra.mxu0 %v63
    %175 = vmatpush.msra.mxu0 %v62
    %176 = vmatpush.msra.mxu0 %v61
    %177 = vmatmul.f32.gmra.mxu0 %v40
    %v178 = vpop.f32.mrf.mxu0
    %v179 = vadd.f32 %v159, %v178
    %180 = vdwg.mxu0
    %181 = vmatpush.msra.mxu0 %v92
    %182 = vmatpush.msra.mxu0 %v91
    %183 = vmatpush.msra.mxu0 %v90
    %184 = vmatpush.msra.mxu0 %v89
    %185 = vmatpush.msra.mxu0 %v88
    %186 = vmatpush.msra.mxu0 %v87
    %187 = vmatpush.msra.mxu0 %v86
    %188 = vmatpush.msra.mxu0 %v85
    %189 = vmatpush.msra.mxu0 %v84
    %190 = vmatpush.msra.mxu0 %v83
    %191 = vmatpush.msra.mxu0 %v82
    %192 = vmatpush.msra.mxu0 %v81
    %193 = vmatpush.msra.mxu0 %v80
    %194 = vmatpush.msra.mxu0 %v79
    %195 = vmatpush.msra.mxu0 %v78
    %196 = vmatpush.msra.mxu0 %v77
    %197 = vmatmul.f32.gmra.mxu0 %v41
    %v198 = vpop.f32.mrf.mxu0
    %v199 = vadd.f32 %v179, %v198
    %200 = vdwg.mxu0
    %201 = vmatpush.msra.mxu0 %v108
    %202 = vmatpush.msra.mxu0 %v107
    %203 = vmatpush.msra.mxu0 %v106
    %204 = vmatpush.msra.mxu0 %v105
    %205 = vmatpush.msra.mxu0 %v104
    %206 = vmatpush.msra.mxu0 %v103
    %207 = vmatpush.msra.mxu0 %v102
    %208 = vmatpush.msra.mxu0 %v101
    %209 = vmatpush.msra.mxu0 %v100
    %210 = vmatpush.msra.mxu0 %v99
    %211 = vmatpush.msra.mxu0 %v98
    %212 = vmatpush.msra.mxu0 %v97
    %213 = vmatpush.msra.mxu0 %v96
    %214 = vmatpush.msra.mxu0 %v95
    %215 = vmatpush.msra.mxu0 %v94
    %216 = vmatpush.msra.mxu0 %v93
    %217 = vmatmul.f32.gmra.mxu0 %v42
    %v218 = vpop.f32.mrf.mxu0
    %v219 = vadd.f32 %v199, %v218
    %220 = vdwg.mxu0
    %221 = vmatpush.msra.mxu0 %v124
    %222 = vmatpush.msra.mxu0 %v123
    %223 = vmatpush.msra.mxu0 %v122
    %224 = vmatpush.msra.mxu0 %v121
    %225 = vmatpush.msra.mxu0 %v120
    %226 = vmatpush.msra.mxu0 %v119
    %227 = vmatpush.msra.mxu0 %v118
    %228 = vmatpush.msra.mxu0 %v117
    %229 = vmatpush.msra.mxu0 %v116
    %230 = vmatpush.msra.mxu0 %v115
    %231 = vmatpush.msra.mxu0 %v114
    %232 = vmatpush.msra.mxu0 %v113
    %233 = vmatpush.msra.mxu0 %v112
    %234 = vmatpush.msra.mxu0 %v111
    %235 = vmatpush.msra.mxu0 %v110
    %236 = vmatpush.msra.mxu0 %v109
    %237 = vmatmul.f32.gmra.mxu0 %v43
    %v238 = vpop.f32.mrf.mxu0
    %v239 = vadd.f32 %v219, %v238
    %240 = vdwg.mxu0
    %241 = vmatpush.msra.mxu0 %v140
    %242 = vmatpush.msra.mxu0 %v139
    %243 = vmatpush.msra.mxu0 %v138
    %244 = vmatpush.msra.mxu0 %v137
    %245 = vmatpush.msra.mxu0 %v136
    %246 = vmatpush.msra.mxu0 %v135
    %247 = vmatpush.msra.mxu0 %v134
    %248 = vmatpush.msra.mxu0 %v133
    %249 = vmatpush.msra.mxu0 %v132
    %250 = vmatpush.msra.mxu0 %v131
    %251 = vmatpush.msra.mxu0 %v130
    %252 = vmatpush.msra.mxu0 %v129
    %253 = vmatpush.msra.mxu0 %v128
    %254 = vmatpush.msra.mxu0 %v127
    %255 = vmatpush.msra.mxu0 %v126
    %256 = vmatpush.msra.mxu0 %v125
    %257 = vmatmul.f32.gmra.mxu0 %v44
    %v258 = vpop.f32.mrf.mxu0
    %v259 = vadd.f32 %v239, %v258
    %260 = vdwg.mxu0
    %v261 = vld [vmem:[%s2] sm:$0xff]
    %v262 = vld [vmem:[%s2 + $0x8] sm:$0xff]
    %v263 = vld [vmem:[%s3] sm:$0xff]
    %v264 = vld [vmem:[%s3 + $0x8] sm:$0xff]
    %vm265 = vcmask 64512
    %v267 = vsel %vm265, %v261, 0
    %v270 = vsel %vm265, %v262, 0
    %272 = vmatpush.msra.mxu0 0.0
    %273 = vmatpush.msra.mxu0 0.0
    %274 = vmatpush.msra.mxu0 0.0
    %275 = vmatpush.msra.mxu0 0.0
    %276 = vmatpush.msra.mxu0 0.0
    %277 = vmatpush.msra.mxu0 0.0
    %278 = vmatpush.msra.mxu0 0.0
    %279 = vmatpush.msra.mxu0 0.0
    %280 = vmatpush.msra.mxu0 0.0
    %281 = vmatpush.msra.mxu0 0.0
    %282 = vmatpush.msra.mxu0 0.0
    %283 = vmatpush.msra.mxu0 0.0
    %284 = vmatpush.msra.mxu0 0.0
    %285 = vmatpush.msra.mxu0 0.0
    %286 = vmatpush.msra.mxu0 0.0
    %287 = vmatpush.msra.mxu0 %v259
    %288 = vmatmul.f32.gmra.mxu0 %v267
    %v289 = vpop.f32.mrf.mxu0
    %v290 = vadd.f32 %v263, %v289
    %291 = vmatmul.f32.gmra.mxu0 %v270
    %v292 = vpop.f32.mrf.mxu0
    %v293 = vadd.f32 %v264, %v292
    %294 = vdwg.mxu0
    %v295 = vld [vmem:[%s4] sm:$0xff]
    %v296 = vld [vmem:[%s4 + $0x8] sm:$0xff]
    %v297 = vld [vmem:[%s10] sm:$0xff]
    %v298 = vld [vmem:[%s10 + $0x8] sm:$0xff]
    %v299 = vld [vmem:[%s6] sm:$0xff]
    %v300 = vld [vmem:[%s6 + $0x8] sm:$0xff]
    %v301 = vld [vmem:[%s6 + $0x10] sm:$0xff]
    %v302 = vld [vmem:[%s6 + $0x18] sm:$0xff]
    %v303 = vld [vmem:[%s6 + $0x20] sm:$0xff]
    %v304 = vld [vmem:[%s6 + $0x28] sm:$0xff]
    %v305 = vld [vmem:[%s6 + $0x30] sm:$0xff]
    %v306 = vld [vmem:[%s6 + $0x38] sm:$0xff]
    %v307 = vld [vmem:[%s6 + $0x40] sm:$0xff]
    %v308 = vld [vmem:[%s6 + $0x48] sm:$0xff]
    %v309 = vld [vmem:[%s6 + $0x50] sm:$0xff]
    %v310 = vld [vmem:[%s6 + $0x58] sm:$0xff]
    %v311 = vld [vmem:[%s6 + $0x60] sm:$0xff]
    %v312 = vld [vmem:[%s6 + $0x68] sm:$0xff]
    %v313 = vld [vmem:[%s6 + $0x70] sm:$0xff]
    %v314 = vld [vmem:[%s6 + $0x78] sm:$0xff]
    %v315 = vld [vmem:[%s7] sm:$0xff]
    %v316 = vld [vmem:[%s7 + $0x8] sm:$0xff]
    %v317 = vld [vmem:[%s7 + $0x10] sm:$0xff]
    %v318 = vld [vmem:[%s7 + $0x18] sm:$0xff]
    %v319 = vld [vmem:[%s7 + $0x20] sm:$0xff]
    %v320 = vld [vmem:[%s7 + $0x28] sm:$0xff]
    %v321 = vld [vmem:[%s7 + $0x30] sm:$0xff]
    %v322 = vld [vmem:[%s7 + $0x38] sm:$0xff]
    %v323 = vld [vmem:[%s8] sm:$0xff]
    %v324 = vld [vmem:[%s8 + $0x8] sm:$0xff]
    %v325 = vld [vmem:[%s8 + $0x10] sm:$0xff]
    %v326 = vld [vmem:[%s8 + $0x18] sm:$0xff]
    %v327 = vld [vmem:[%s8 + $0x20] sm:$0xff]
    %v328 = vld [vmem:[%s8 + $0x28] sm:$0xff]
    %v329 = vld [vmem:[%s8 + $0x30] sm:$0xff]
    %v330 = vld [vmem:[%s8 + $0x38] sm:$0xff]
    %v331 = vld [vmem:[%s9] sm:$0xff]
    %v332 = vld [vmem:[%s9 + $0x8] sm:$0xff]
    %v333 = vld [vmem:[%s9 + $0x10] sm:$0xff]
    %v334 = vld [vmem:[%s9 + $0x18] sm:$0xff]
    %v335 = vld [vmem:[%s9 + $0x20] sm:$0xff]
    %v336 = vld [vmem:[%s9 + $0x28] sm:$0xff]
    %v337 = vld [vmem:[%s9 + $0x30] sm:$0xff]
    %v338 = vld [vmem:[%s9 + $0x38] sm:$0xff]
    %v339 = vld [vmem:[%s9 + $0x40] sm:$0xff]
    %v340 = vld [vmem:[%s9 + $0x48] sm:$0xff]
    %v341 = vld [vmem:[%s9 + $0x50] sm:$0xff]
    %v342 = vld [vmem:[%s9 + $0x58] sm:$0xff]
    %v343 = vld [vmem:[%s9 + $0x60] sm:$0xff]
    %v344 = vld [vmem:[%s9 + $0x68] sm:$0xff]
    %v345 = vld [vmem:[%s9 + $0x70] sm:$0xff]
    %v346 = vld [vmem:[%s9 + $0x78] sm:$0xff]
    %vm347 = vcmask 523264
    %v348 = vsel %vm347, %v290, 0.0
    %349 = vadd.xlane.f32.xlu0 %v348
    %v350 = vpop.xlane.xlu0 %349
    %v351 = vsel %vm347, %v293, 0.0
    %352 = vadd.xlane.f32.xlu0 %v351
    %v353 = vpop.xlane.xlu0 %352
    %v354 = vrcp.pop 64.0
    %v355 = vmul.f32 64.0, %v354
    %v356 = vsub.f32 1.0, %v355
    %v357 = vmul.f32 %v354, %v356
    %v358 = vadd.f32 %v354, %v357
    %vm359 = vweird.f32 %v354
    %v360 = vsel %vm359, %v354, %v358
    %v361 = vmul.f32 %v350, %v360
    %v362 = vmul.f32 %v353, %v360
    %v363 = vsub.f32 %v290, %v361
    %v364 = vsub.f32 %v293, %v362
    %v365 = vmul.f32 %v363, %v363
    %v366 = vmul.f32 %v364, %v364
    %v367 = vsel %vm347, %v365, 0.0
    %368 = vadd.xlane.f32.xlu0 %v367
    %v369 = vpop.xlane.xlu0 %368
    %v370 = vsel %vm347, %v366, 0.0
    %371 = vadd.xlane.f32.xlu0 %v370
    %v372 = vpop.xlane.xlu0 %371
    %v373 = vmul.f32 %v369, %v360
    %v374 = vmul.f32 %v372, %v360
    %v375 = vadd.f32 %v373, 1e-12
    %v376 = vadd.f32 %v374, 1e-12
    %v377 = vrsqrt.pop %v375
    %v378 = vmul.f32 %v377, %v375
    %v379 = vmul.f32 %v378, %v377
    %v380 = vmul.f32 0.5, %v379
    %v381 = vsub.f32 1.5, %v380
    %v382 = vmul.f32 %v377, %v381
    %vm383 = vweird.f32 %v375
    %vm384 = vweird.f32 %v377
    %vm385 = vmor %vm383, %vm384
    %v386 = vsel %vm385, %v377, %v382
    %v387 = vrsqrt.pop %v376
    %v388 = vmul.f32 %v387, %v376
    %v389 = vmul.f32 %v388, %v387
    %v390 = vmul.f32 0.5, %v389
    %v391 = vsub.f32 1.5, %v390
    %v392 = vmul.f32 %v387, %v391
    %vm393 = vweird.f32 %v376
    %vm394 = vweird.f32 %v387
    %vm395 = vmor %vm393, %vm394
    %v396 = vsel %vm395, %v387, %v392
    %v397 = vmul.f32 %v363, %v386
    %v398 = vmul.f32 %v364, %v396
    %v399 = vperm.slane %v297, 0
    %v400 = vmul.f32 %v397, %v399
    %v401 = vmul.f32 %v398, %v399
    %v402 = vperm.slane %v297, 1
    %v403 = vadd.f32 %v400, %v402
    %v404 = vadd.f32 %v401, %v402
    %v405 = vperm.slane %v297, 2
    %v406 = vperm.slane %v298, 2
    %v408 = vsel %vm347, %v403, 0
    %v411 = vsel %vm347, %v404, 0
    %413 = vmatpush.msra.mxu0 0.0
    %414 = vmatpush.msra.mxu0 0.0
    %415 = vmatpush.msra.mxu0 0.0
    %416 = vmatpush.msra.mxu0 0.0
    %417 = vmatpush.msra.mxu0 0.0
    %418 = vmatpush.msra.mxu0 0.0
    %419 = vmatpush.msra.mxu0 0.0
    %420 = vmatpush.msra.mxu0 0.0
    %421 = vmatpush.msra.mxu0 %v313
    %422 = vmatpush.msra.mxu0 %v311
    %423 = vmatpush.msra.mxu0 %v309
    %424 = vmatpush.msra.mxu0 %v307
    %425 = vmatpush.msra.mxu0 %v305
    %426 = vmatpush.msra.mxu0 %v303
    %427 = vmatpush.msra.mxu0 %v301
    %428 = vmatpush.msra.mxu0 %v299
    %429 = vmatmul.f32.gmra.mxu0 %v408
    %v430 = vpop.f32.mrf.mxu0
    %v431 = vadd.f32 %v405, %v430
    %432 = vmatmul.f32.gmra.mxu0 %v411
    %v433 = vpop.f32.mrf.mxu0
    %v434 = vadd.f32 %v405, %v433
    %435 = vdwg.mxu0
    %436 = vmatpush.msra.mxu0 0.0
    %437 = vmatpush.msra.mxu0 0.0
    %438 = vmatpush.msra.mxu0 0.0
    %439 = vmatpush.msra.mxu0 0.0
    %440 = vmatpush.msra.mxu0 0.0
    %441 = vmatpush.msra.mxu0 0.0
    %442 = vmatpush.msra.mxu0 0.0
    %443 = vmatpush.msra.mxu0 0.0
    %444 = vmatpush.msra.mxu0 %v314
    %445 = vmatpush.msra.mxu0 %v312
    %446 = vmatpush.msra.mxu0 %v310
    %447 = vmatpush.msra.mxu0 %v308
    %448 = vmatpush.msra.mxu0 %v306
    %449 = vmatpush.msra.mxu0 %v304
    %450 = vmatpush.msra.mxu0 %v302
    %451 = vmatpush.msra.mxu0 %v300
    %452 = vmatmul.f32.gmra.mxu0 %v408
    %v453 = vpop.f32.mrf.mxu0
    %v454 = vadd.f32 %v406, %v453
    %455 = vmatmul.f32.gmra.mxu0 %v411
    %v456 = vpop.f32.mrf.mxu0
    %v457 = vadd.f32 %v406, %v456
    %458 = vdwg.mxu0
    %461 = vrot.lane.b32.xlu0 %v431, 64
    %v462 = vpop.permute.xlu0 %461
    %463 = vrot.lane.b32.xlu0 %v434, 64
    %v464 = vpop.permute.xlu0 %463
    %vm465 = vcmask 261120
    %v466 = vsel %vm465, %v431, 0
    %v468 = vsel %vm465, %v434, 0
    %v470 = vsel %vm465, %v462, 0
    %v472 = vsel %vm465, %v464, 0
    %474 = vmatpush.xpose.msra.mxu0 0.0
    %475 = vmatpush.xpose.msra.mxu0 0.0
    %476 = vmatpush.xpose.msra.mxu0 0.0
    %477 = vmatpush.xpose.msra.mxu0 0.0
    %478 = vmatpush.xpose.msra.mxu0 0.0
    %479 = vmatpush.xpose.msra.mxu0 0.0
    %480 = vmatpush.xpose.msra.mxu0 0.0
    %481 = vmatpush.xpose.msra.mxu0 0.0
    %482 = vmatpush.xpose.msra.mxu0 0.0
    %483 = vmatpush.xpose.msra.mxu0 0.0
    %484 = vmatpush.xpose.msra.mxu0 0.0
    %485 = vmatpush.xpose.msra.mxu0 0.0
    %486 = vmatpush.xpose.msra.mxu0 0.0
    %487 = vmatpush.xpose.msra.mxu0 0.0
    %488 = vmatpush.xpose.msra.mxu0 %v472
    %489 = vmatpush.xpose.msra.mxu0 %v470
    %490 = vmatmul.f32.gmra.mxu0 %v466
    %v491 = vpop.f32.mrf.mxu0
    %v492 = vadd.f32 %v295, %v491
    %493 = vmatmul.f32.gmra.mxu0 %v468
    %v494 = vpop.f32.mrf.mxu0
    %v495 = vadd.f32 %v296, %v494
    %496 = vdwg.mxu0
    %vm497 = vcmask 130048
    %v498 = vsel %vm497, %v492, -inf
    %499 = vmax.xlane.f32.xlu0 %v498
    %v500 = vpop.xlane.xlu0 %499
    %v501 = vsel %vm497, %v495, -inf
    %502 = vmax.xlane.f32.xlu0 %v501
    %v503 = vpop.xlane.xlu0 %502
    %v504 = vsub.f32 %v492, %v500
    %v505 = vsub.f32 %v495, %v503
    %v506 = vmul.f32 %v504, 1.442695
    %v507 = vpow.pop %v506
    %v508 = vmul.f32 %v505, 1.442695
    %v509 = vpow.pop %v508
    %v510 = vsel %vm497, %v507, 0.0
    %511 = vadd.xlane.f32.xlu0 %v510
    %v512 = vpop.xlane.xlu0 %511
    %v513 = vsel %vm497, %v509, 0.0
    %514 = vadd.xlane.f32.xlu0 %v513
    %v515 = vpop.xlane.xlu0 %514
    %v516 = vrcp.pop %v512
    %v517 = vrcp.pop %v515
    %v518 = vmul.f32 %v507, %v516
    %v519 = vmul.f32 %v509, %v517
    %v521 = vsel %vm497, %v518, 0
    %v524 = vsel %vm497, %v519, 0
    %526 = vmatpush.msra.mxu0 0.0
    %527 = vmatpush.msra.mxu0 0.0
    %528 = vmatpush.msra.mxu0 0.0
    %529 = vmatpush.msra.mxu0 0.0
    %530 = vmatpush.msra.mxu0 0.0
    %531 = vmatpush.msra.mxu0 0.0
    %532 = vmatpush.msra.mxu0 0.0
    %533 = vmatpush.msra.mxu0 0.0
    %534 = vmatpush.msra.mxu0 0.0
    %535 = vmatpush.msra.mxu0 0.0
    %536 = vmatpush.msra.mxu0 0.0
    %537 = vmatpush.msra.mxu0 0.0
    %538 = vmatpush.msra.mxu0 0.0
    %539 = vmatpush.msra.mxu0 0.0
    %540 = vmatpush.msra.mxu0 %v457
    %541 = vmatpush.msra.mxu0 %v454
    %542 = vmatmul.f32.gmra.mxu0 %v521
    %v543 = vpop.f32.mrf.mxu0
    %v544 = vadd.f32 0.0, %v543
    %545 = vmatmul.f32.gmra.mxu0 %v524
    %v546 = vpop.f32.mrf.mxu0
    %v547 = vadd.f32 0.0, %v546
    %548 = vdwg.mxu0
    %549 = vrot.lane.b32.xlu0 %v431, 96
    %v550 = vpop.permute.xlu0 %549
    %551 = vrot.lane.b32.xlu0 %v434, 96
    %v552 = vpop.permute.xlu0 %551
    %553 = vrot.lane.b32.xlu0 %v431, 32
    %v554 = vpop.permute.xlu0 %553
    %555 = vrot.lane.b32.xlu0 %v434, 32
    %v556 = vpop.permute.xlu0 %555
    %v557 = vsel %vm465, %v550, 0
    %v559 = vsel %vm465, %v552, 0
    %v561 = vsel %vm465, %v554, 0
    %v563 = vsel %vm465, %v556, 0
    %565 = vmatpush.xpose.msra.mxu0 0.0
    %566 = vmatpush.xpose.msra.mxu0 0.0
    %567 = vmatpush.xpose.msra.mxu0 0.0
    %568 = vmatpush.xpose.msra.mxu0 0.0
    %569 = vmatpush.xpose.msra.mxu0 0.0
    %570 = vmatpush.xpose.msra.mxu0 0.0
    %571 = vmatpush.xpose.msra.mxu0 0.0
    %572 = vmatpush.xpose.msra.mxu0 0.0
    %573 = vmatpush.xpose.msra.mxu0 0.0
    %574 = vmatpush.xpose.msra.mxu0 0.0
    %575 = vmatpush.xpose.msra.mxu0 0.0
    %576 = vmatpush.xpose.msra.mxu0 0.0
    %577 = vmatpush.xpose.msra.mxu0 0.0
    %578 = vmatpush.xpose.msra.mxu0 0.0
    %579 = vmatpush.xpose.msra.mxu0 %v563
    %580 = vmatpush.xpose.msra.mxu0 %v561
    %581 = vmatmul.f32.gmra.mxu0 %v557
    %v582 = vpop.f32.mrf.mxu0
    %v583 = vadd.f32 %v295, %v582
    %584 = vmatmul.f32.gmra.mxu0 %v559
    %v585 = vpop.f32.mrf.mxu0
    %v586 = vadd.f32 %v296, %v585
    %587 = vdwg.mxu0
    %v588 = vsel %vm497, %v583, -inf
    %589 = vmax.xlane.f32.xlu0 %v588
    %v590 = vpop.xlane.xlu0 %589
    %v591 = vsel %vm497, %v586, -inf
    %592 = vmax.xlane.f32.xlu0 %v591
    %v593 = vpop.xlane.xlu0 %592
    %v594 = vsub.f32 %v583, %v590
    %v595 = vsub.f32 %v586, %v593
    %v596 = vmul.f32 %v594, 1.442695
    %v597 = vpow.pop %v596
    %v598 = vmul.f32 %v595, 1.442695
    %v599 = vpow.pop %v598
    %v600 = vsel %vm497, %v597, 0.0
    %601 = vadd.xlane.f32.xlu0 %v600
    %v602 = vpop.xlane.xlu0 %601
    %v603 = vsel %vm497, %v599, 0.0
    %604 = vadd.xlane.f32.xlu0 %v603
    %v605 = vpop.xlane.xlu0 %604
    %v606 = vrcp.pop %v602
    %v607 = vrcp.pop %v605
    %v608 = vmul.f32 %v597, %v606
    %v609 = vmul.f32 %v599, %v607
    %612 = vrot.lane.b32.xlu0 %v454, 96
    %v613 = vpop.permute.xlu0 %612
    %614 = vrot.lane.b32.xlu0 %v457, 96
    %v615 = vpop.permute.xlu0 %614
    %v619 = vsel %vm497, %v608, 0
    %v622 = vsel %vm497, %v609, 0
    %624 = vmatpush.msra.mxu0 0.0
    %625 = vmatpush.msra.mxu0 0.0
    %626 = vmatpush.msra.mxu0 0.0
    %627 = vmatpush.msra.mxu0 0.0
    %628 = vmatpush.msra.mxu0 0.0
    %629 = vmatpush.msra.mxu0 0.0
    %630 = vmatpush.msra.mxu0 0.0
    %631 = vmatpush.msra.mxu0 0.0
    %632 = vmatpush.msra.mxu0 0.0
    %633 = vmatpush.msra.mxu0 0.0
    %634 = vmatpush.msra.mxu0 0.0
    %635 = vmatpush.msra.mxu0 0.0
    %636 = vmatpush.msra.mxu0 0.0
    %637 = vmatpush.msra.mxu0 0.0
    %638 = vmatpush.msra.mxu0 %v615
    %639 = vmatpush.msra.mxu0 %v613
    %640 = vmatmul.f32.gmra.mxu0 %v619
    %v641 = vpop.f32.mrf.mxu0
    %v642 = vadd.f32 0.0, %v641
    %643 = vmatmul.f32.gmra.mxu0 %v622
    %v644 = vpop.f32.mrf.mxu0
    %v645 = vadd.f32 0.0, %v644
    %646 = vdwg.mxu0
    %v648 = vsel %vm465, %v642, 0
    %v651 = vsel %vm465, %v645, 0
    %653 = vmatpush.msra.mxu0 0.0
    %654 = vmatpush.msra.mxu0 0.0
    %655 = vmatpush.msra.mxu0 0.0
    %656 = vmatpush.msra.mxu0 0.0
    %657 = vmatpush.msra.mxu0 0.0
    %658 = vmatpush.msra.mxu0 0.0
    %659 = vmatpush.msra.mxu0 0.0
    %660 = vmatpush.msra.mxu0 0.0
    %661 = vmatpush.msra.mxu0 0.0
    %662 = vmatpush.msra.mxu0 0.0
    %663 = vmatpush.msra.mxu0 0.0
    %664 = vmatpush.msra.mxu0 0.0
    %665 = vmatpush.msra.mxu0 %v322
    %666 = vmatpush.msra.mxu0 %v321
    %667 = vmatpush.msra.mxu0 %v320
    %668 = vmatpush.msra.mxu0 %v319
    %669 = vmatmul.f32.gmra.mxu0 %v648
    %v670 = vpop.f32.mrf.mxu0
    %v671 = vadd.f32 0.0, %v670
    %672 = vmatmul.f32.gmra.mxu0 %v651
    %v673 = vpop.f32.mrf.mxu0
    %v674 = vadd.f32 0.0, %v673
    %675 = vdwg.mxu0
    %v677 = vsel %vm465, %v544, 0
    %v680 = vsel %vm465, %v547, 0
    %682 = vmatpush.msra.mxu0 0.0
    %683 = vmatpush.msra.mxu0 0.0
    %684 = vmatpush.msra.mxu0 0.0
    %685 = vmatpush.msra.mxu0 0.0
    %686 = vmatpush.msra.mxu0 0.0
    %687 = vmatpush.msra.mxu0 0.0
    %688 = vmatpush.msra.mxu0 0.0
    %689 = vmatpush.msra.mxu0 0.0
    %690 = vmatpush.msra.mxu0 0.0
    %691 = vmatpush.msra.mxu0 0.0
    %692 = vmatpush.msra.mxu0 0.0
    %693 = vmatpush.msra.mxu0 0.0
    %694 = vmatpush.msra.mxu0 %v318
    %695 = vmatpush.msra.mxu0 %v317
    %696 = vmatpush.msra.mxu0 %v316
    %697 = vmatpush.msra.mxu0 %v315
    %698 = vmatmul.f32.gmra.mxu0 %v677
    %v699 = vpop.f32.mrf.mxu0
    %v700 = vadd.f32 %v671, %v699
    %701 = vmatmul.f32.gmra.mxu0 %v680
    %v702 = vpop.f32.mrf.mxu0
    %v703 = vadd.f32 %v674, %v702
    %704 = vdwg.mxu0
    %v705 = vadd.f32 %v290, %v700
    %v706 = vadd.f32 %v293, %v703
    %v707 = vperm.slane %v297, 3
    %v708 = vadd.f32 %v705, %v707
    %v709 = vadd.f32 %v706, %v707
    %v710 = vsel %vm347, %v708, 0.0
    %711 = vadd.xlane.f32.xlu0 %v710
    %v712 = vpop.xlane.xlu0 %711
    %v713 = vsel %vm347, %v709, 0.0
    %714 = vadd.xlane.f32.xlu0 %v713
    %v715 = vpop.xlane.xlu0 %714
    %v716 = vmul.f32 %v712, %v360
    %v717 = vmul.f32 %v715, %v360
    %v718 = vsub.f32 %v708, %v716
    %v719 = vsub.f32 %v709, %v717
    %v720 = vmul.f32 %v718, %v718
    %v721 = vmul.f32 %v719, %v719
    %v722 = vsel %vm347, %v720, 0.0
    %723 = vadd.xlane.f32.xlu0 %v722
    %v724 = vpop.xlane.xlu0 %723
    %v725 = vsel %vm347, %v721, 0.0
    %726 = vadd.xlane.f32.xlu0 %v725
    %v727 = vpop.xlane.xlu0 %726
    %v728 = vmul.f32 %v724, %v360
    %v729 = vmul.f32 %v727, %v360
    %v730 = vadd.f32 %v728, 1e-12
    %v731 = vadd.f32 %v729, 1e-12
    %v732 = vrsqrt.pop %v730
    %v733 = vmul.f32 %v732, %v730
    %v734 = vmul.f32 %v733, %v732
    %v735 = vmul.f32 0.5, %v734
    %v736 = vsub.f32 1.5, %v735
    %v737 = vmul.f32 %v732, %v736
    %vm738 = vweird.f32 %v730
    %vm739 = vweird.f32 %v732
    %vm740 = vmor %vm738, %vm739
    %v741 = vsel %vm740, %v732, %v737
    %v742 = vrsqrt.pop %v731
    %v743 = vmul.f32 %v742, %v731
    %v744 = vmul.f32 %v743, %v742
    %v745 = vmul.f32 0.5, %v744
    %v746 = vsub.f32 1.5, %v745
    %v747 = vmul.f32 %v742, %v746
    %vm748 = vweird.f32 %v731
    %vm749 = vweird.f32 %v742
    %vm750 = vmor %vm748, %vm749
    %v751 = vsel %vm750, %v742, %v747
    %v752 = vmul.f32 %v718, %v741
    %v753 = vmul.f32 %v719, %v751
    %v754 = vperm.slane %v297, 4
    %v755 = vmul.f32 %v752, %v754
    %v756 = vmul.f32 %v753, %v754
    %v757 = vperm.slane %v297, 5
    %v758 = vadd.f32 %v755, %v757
    %v759 = vadd.f32 %v756, %v757
    %v760 = vperm.slane %v297, 6
    %v762 = vsel %vm347, %v758, 0
    %v765 = vsel %vm347, %v759, 0
    %767 = vmatpush.msra.mxu0 0.0
    %768 = vmatpush.msra.mxu0 0.0
    %769 = vmatpush.msra.mxu0 0.0
    %770 = vmatpush.msra.mxu0 0.0
    %771 = vmatpush.msra.mxu0 0.0
    %772 = vmatpush.msra.mxu0 0.0
    %773 = vmatpush.msra.mxu0 0.0
    %774 = vmatpush.msra.mxu0 0.0
    %775 = vmatpush.msra.mxu0 %v330
    %776 = vmatpush.msra.mxu0 %v329
    %777 = vmatpush.msra.mxu0 %v328
    %778 = vmatpush.msra.mxu0 %v327
    %779 = vmatpush.msra.mxu0 %v326
    %780 = vmatpush.msra.mxu0 %v325
    %781 = vmatpush.msra.mxu0 %v324
    %782 = vmatpush.msra.mxu0 %v323
    %783 = vmatmul.f32.gmra.mxu0 %v762
    %v784 = vpop.f32.mrf.mxu0
    %v785 = vadd.f32 %v760, %v784
    %786 = vmatmul.f32.gmra.mxu0 %v765
    %v787 = vpop.f32.mrf.mxu0
    %v788 = vadd.f32 %v760, %v787
    %789 = vdwg.mxu0
    %v790 = vmul.f32 %v785, %v785
    %v791 = vmul.f32 %v788, %v788
    %v792 = vmul.f32 %v785, %v790
    %v793 = vmul.f32 %v788, %v791
    %v794 = vmul.f32 %v792, 0.044715
    %v795 = vmul.f32 %v793, 0.044715
    %v796 = vadd.f32 %v785, %v794
    %v797 = vadd.f32 %v788, %v795
    %v798 = vmul.f32 %v796, 0.7978846
    %v799 = vmul.f32 %v797, 0.7978846
    %v800 = vtanh.pop %v798
    %v801 = vtanh.pop %v799
    %v802 = vadd.f32 %v800, 1.0
    %v803 = vadd.f32 %v801, 1.0
    %v804 = vmul.f32 %v802, 0.5
    %v805 = vmul.f32 %v803, 0.5
    %v806 = vmul.f32 %v785, %v804
    %v807 = vmul.f32 %v788, %v805
    %808 = vmatpush.msra.mxu0 %v346
    %809 = vmatpush.msra.mxu0 %v345
    %810 = vmatpush.msra.mxu0 %v344
    %811 = vmatpush.msra.mxu0 %v343
    %812 = vmatpush.msra.mxu0 %v342
    %813 = vmatpush.msra.mxu0 %v341
    %814 = vmatpush.msra.mxu0 %v340
    %815 = vmatpush.msra.mxu0 %v339
    %816 = vmatpush.msra.mxu0 %v338
    %817 = vmatpush.msra.mxu0 %v337
    %818 = vmatpush.msra.mxu0 %v336
    %819 = vmatpush.msra.mxu0 %v335
    %820 = vmatpush.msra.mxu0 %v334
    %821 = vmatpush.msra.mxu0 %v333
    %822 = vmatpush.msra.mxu0 %v332
    %823 = vmatpush.msra.mxu0 %v331
    %824 = vmatmul.f32.gmra.mxu0 %v806
    %v825 = vpop.f32.mrf.mxu0
    %v826 = vadd.f32 0.0, %v825
    %827 = vmatmul.f32.gmra.mxu0 %v807
    %v828 = vpop.f32.mrf.mxu0
    %v829 = vadd.f32 0.0, %v828
    %830 = vdwg.mxu0
    %v831 = vadd.f32 %v708, %v826
    %v832 = vadd.f32 %v709, %v829
    %v833 = vperm.slane %v297, 7
    %v834 = vadd.f32 %v831, %v833
    %v835 = vadd.f32 %v832, %v833
    %s836 = scalar_lea.vmem %s10, 16
    %v837 = vld [vmem:[%s836] sm:$0xff]
    %v838 = vld [vmem:[%s836 + $0x8] sm:$0xff]
    %s839 = scalar_lea.vmem %s6, 128
    %v840 = vld [vmem:[%s839] sm:$0xff]
    %v841 = vld [vmem:[%s839 + $0x8] sm:$0xff]
    %v842 = vld [vmem:[%s839 + $0x10] sm:$0xff]
    %v843 = vld [vmem:[%s839 + $0x18] sm:$0xff]
    %v844 = vld [vmem:[%s839 + $0x20] sm:$0xff]
    %v845 = vld [vmem:[%s839 + $0x28] sm:$0xff]
    %v846 = vld [vmem:[%s839 + $0x30] sm:$0xff]
    %v847 = vld [vmem:[%s839 + $0x38] sm:$0xff]
    %v848 = vld [vmem:[%s839 + $0x40] sm:$0xff]
    %v849 = vld [vmem:[%s839 + $0x48] sm:$0xff]
    %v850 = vld [vmem:[%s839 + $0x50] sm:$0xff]
    %v851 = vld [vmem:[%s839 + $0x58] sm:$0xff]
    %v852 = vld [vmem:[%s839 + $0x60] sm:$0xff]
    %v853 = vld [vmem:[%s839 + $0x68] sm:$0xff]
    %v854 = vld [vmem:[%s839 + $0x70] sm:$0xff]
    %v855 = vld [vmem:[%s839 + $0x78] sm:$0xff]
    %s856 = scalar_lea.vmem %s7, 64
    %v857 = vld [vmem:[%s856] sm:$0xff]
    %v858 = vld [vmem:[%s856 + $0x8] sm:$0xff]
    %v859 = vld [vmem:[%s856 + $0x10] sm:$0xff]
    %v860 = vld [vmem:[%s856 + $0x18] sm:$0xff]
    %v861 = vld [vmem:[%s856 + $0x20] sm:$0xff]
    %v862 = vld [vmem:[%s856 + $0x28] sm:$0xff]
    %v863 = vld [vmem:[%s856 + $0x30] sm:$0xff]
    %v864 = vld [vmem:[%s856 + $0x38] sm:$0xff]
    %s865 = scalar_lea.vmem %s8, 64
    %v866 = vld [vmem:[%s865] sm:$0xff]
    %v867 = vld [vmem:[%s865 + $0x8] sm:$0xff]
    %v868 = vld [vmem:[%s865 + $0x10] sm:$0xff]
    %v869 = vld [vmem:[%s865 + $0x18] sm:$0xff]
    %v870 = vld [vmem:[%s865 + $0x20] sm:$0xff]
    %v871 = vld [vmem:[%s865 + $0x28] sm:$0xff]
    %v872 = vld [vmem:[%s865 + $0x30] sm:$0xff]
    %v873 = vld [vmem:[%s865 + $0x38] sm:$0xff]
    %s874 = scalar_lea.vmem %s9, 128
    %v875 = vld [vmem:[%s874] sm:$0xff]
    %v876 = vld [vmem:[%s874 + $0x8] sm:$0xff]
    %v877 = vld [vmem:[%s874 + $0x10] sm:$0xff]
    %v878 = vld [vmem:[%s874 + $0x18] sm:$0xff]
    %v879 = vld [vmem:[%s874 + $0x20] sm:$0xff]
    %v880 = vld [vmem:[%s874 + $0x28] sm:$0xff]
    %v881 = vld [vmem:[%s874 + $0x30] sm:$0xff]
    %v882 = vld [vmem:[%s874 + $0x38] sm:$0xff]
    %v883 = vld [vmem:[%s874 + $0x40] sm:$0xff]
    %v884 = vld [vmem:[%s874 + $0x48] sm:$0xff]
    %v885 = vld [vmem:[%s874 + $0x50] sm:$0xff]
    %v886 = vld [vmem:[%s874 + $0x58] sm:$0xff]
    %v887 = vld [vmem:[%s874 + $0x60] sm:$0xff]
    %v888 = vld [vmem:[%s874 + $0x68] sm:$0xff]
    %v889 = vld [vmem:[%s874 + $0x70] sm:$0xff]
    %v890 = vld [vmem:[%s874 + $0x78] sm:$0xff]
    %v891 = vsel %vm347, %v834, 0.0
    %892 = vadd.xlane.f32.xlu0 %v891
    %v893 = vpop.xlane.xlu0 %892
    %v894 = vsel %vm347, %v835, 0.0
    %895 = vadd.xlane.f32.xlu0 %v894
    %v896 = vpop.xlane.xlu0 %895
    %v897 = vmul.f32 %v893, %v360
    %v898 = vmul.f32 %v896, %v360
    %v899 = vsub.f32 %v834, %v897
    %v900 = vsub.f32 %v835, %v898
    %v901 = vmul.f32 %v899, %v899
    %v902 = vmul.f32 %v900, %v900
    %v903 = vsel %vm347, %v901, 0.0
    %904 = vadd.xlane.f32.xlu0 %v903
    %v905 = vpop.xlane.xlu0 %904
    %v906 = vsel %vm347, %v902, 0.0
    %907 = vadd.xlane.f32.xlu0 %v906
    %v908 = vpop.xlane.xlu0 %907
    %v909 = vmul.f32 %v905, %v360
    %v910 = vmul.f32 %v908, %v360
    %v911 = vadd.f32 %v909, 1e-12
    %v912 = vadd.f32 %v910, 1e-12
    %v913 = vrsqrt.pop %v911
    %v914 = vmul.f32 %v913, %v911
    %v915 = vmul.f32 %v914, %v913
    %v916 = vmul.f32 0.5, %v915
    %v917 = vsub.f32 1.5, %v916
    %v918 = vmul.f32 %v913, %v917
    %vm919 = vweird.f32 %v911
    %vm920 = vweird.f32 %v913
    %vm921 = vmor %vm919, %vm920
    %v922 = vsel %vm921, %v913, %v918
    %v923 = vrsqrt.pop %v912
    %v924 = vmul.f32 %v923, %v912
    %v925 = vmul.f32 %v924, %v923
    %v926 = vmul.f32 0.5, %v925
    %v927 = vsub.f32 1.5, %v926
    %v928 = vmul.f32 %v923, %v927
    %vm929 = vweird.f32 %v912
    %vm930 = vweird.f32 %v923
    %vm931 = vmor %vm929, %vm930
    %v932 = vsel %vm931, %v923, %v928
    %v933 = vmul.f32 %v899, %v922
    %v934 = vmul.f32 %v900, %v932
    %v935 = vperm.slane %v837, 0
    %v936 = vmul.f32 %v933, %v935
    %v937 = vmul.f32 %v934, %v935
    %v938 = vperm.slane %v837, 1
    %v939 = vadd.f32 %v936, %v938
    %v940 = vadd.f32 %v937, %v938
    %v941 = vperm.slane %v837, 2
    %v942 = vperm.slane %v838, 2
    %v944 = vsel %vm347, %v939, 0
    %v947 = vsel %vm347, %v940, 0
    %949 = vmatpush.msra.mxu0 0.0
    %950 = vmatpush.msra.mxu0 0.0
    %951 = vmatpush.msra.mxu0 0.0
    %952 = vmatpush.msra.mxu0 0.0
    %953 = vmatpush.msra.mxu0 0.0
    %954 = vmatpush.msra.mxu0 0.0
    %955 = vmatpush.msra.mxu0 0.0
    %956 = vmatpush.msra.mxu0 0.0
    %957 = vmatpush.msra.mxu0 %v854
    %958 = vmatpush.msra.mxu0 %v852
    %959 = vmatpush.msra.mxu0 %v850
    %960 = vmatpush.msra.mxu0 %v848
    %961 = vmatpush.msra.mxu0 %v846
    %962 = vmatpush.msra.mxu0 %v844
    %963 = vmatpush.msra.mxu0 %v842
    %964 = vmatpush.msra.mxu0 %v840
    %965 = vmatmul.f32.gmra.mxu0 %v944
    %v966 = vpop.f32.mrf.mxu0
    %v967 = vadd.f32 %v941, %v966
    %968 = vmatmul.f32.gmra.mxu0 %v947
    %v969 = vpop.f32.mrf.mxu0
    %v970 = vadd.f32 %v941, %v969
    %971 = vdwg.mxu0
    %972 = vmatpush.msra.mxu0 0.0
    %973 = vmatpush.msra.mxu0 0.0
    %974 = vmatpush.msra.mxu0 0.0
    %975 = vmatpush.msra.mxu0 0.0
    %976 = vmatpush.msra.mxu0 0.0
    %977 = vmatpush.msra.mxu0 0.0
    %978 = vmatpush.msra.mxu0 0.0
    %979 = vmatpush.msra.mxu0 0.0
    %980 = vmatpush.msra.mxu0 %v855
    %981 = vmatpush.msra.mxu0 %v853
    %982 = vmatpush.msra.mxu0 %v851
    %983 = vmatpush.msra.mxu0 %v849
    %984 = vmatpush.msra.mxu0 %v847
    %985 = vmatpush.msra.mxu0 %v845
    %986 = vmatpush.msra.mxu0 %v843
    %987 = vmatpush.msra.mxu0 %v841
    %988 = vmatmul.f32.gmra.mxu0 %v944
    %v989 = vpop.f32.mrf.mxu0
    %v990 = vadd.f32 %v942, %v989
    %991 = vmatmul.f32.gmra.mxu0 %v947
    %v992 = vpop.f32.mrf.mxu0
    %v993 = vadd.f32 %v942, %v992
    %994 = vdwg.mxu0
    %997 = vrot.lane.b32.xlu0 %v967, 64
    %v998 = vpop.permute.xlu0 %997
    %999 = vrot.lane.b32.xlu0 %v970, 64
    %v1000 = vpop.permute.xlu0 %999
    %v1001 = vsel %vm465, %v967, 0
    %v1003 = vsel %vm465, %v970, 0
    %v1005 = vsel %vm465, %v998, 0
    %v1007 = vsel %vm465, %v1000, 0
    %1009 = vmatpush.xpose.msra.mxu0 0.0
    %1010 = vmatpush.xpose.msra.mxu0 0.0
    %1011 = vmatpush.xpose.msra.mxu0 0.0
    %1012 = vmatpush.xpose.msra.mxu0 0.0
    %1013 = vmatpush.xpose.msra.mxu0 0.0
    %1014 = vmatpush.xpose.msra.mxu0 0.0
    %1015 = vmatpush.xpose.msra.mxu0 0.0
    %1016 = vmatpush.xpose.msra.mxu0 0.0
    %1017 = vmatpush.xpose.msra.mxu0 0.0
    %1018 = vmatpush.xpose.msra.mxu0 0.0
    %1019 = vmatpush.xpose.msra.mxu0 0.0
    %1020 = vmatpush.xpose.msra.mxu0 0.0
    %1021 = vmatpush.xpose.msra.mxu0 0.0
    %1022 = vmatpush.xpose.msra.mxu0 0.0
    %1023 = vmatpush.xpose.msra.mxu0 %v1007
    %1024 = vmatpush.xpose.msra.mxu0 %v1005
    %1025 = vmatmul.f32.gmra.mxu0 %v1001
    %v1026 = vpop.f32.mrf.mxu0
    %v1027 = vadd.f32 %v295, %v1026
    %1028 = vmatmul.f32.gmra.mxu0 %v1003
    %v1029 = vpop.f32.mrf.mxu0
    %v1030 = vadd.f32 %v296, %v1029
    %1031 = vdwg.mxu0
    %v1032 = vsel %vm497, %v1027, -inf
    %1033 = vmax.xlane.f32.xlu0 %v1032
    %v1034 = vpop.xlane.xlu0 %1033
    %v1035 = vsel %vm497, %v1030, -inf
    %1036 = vmax.xlane.f32.xlu0 %v1035
    %v1037 = vpop.xlane.xlu0 %1036
    %v1038 = vsub.f32 %v1027, %v1034
    %v1039 = vsub.f32 %v1030, %v1037
    %v1040 = vmul.f32 %v1038, 1.442695
    %v1041 = vpow.pop %v1040
    %v1042 = vmul.f32 %v1039, 1.442695
    %v1043 = vpow.pop %v1042
    %v1044 = vsel %vm497, %v1041, 0.0
    %1045 = vadd.xlane.f32.xlu0 %v1044
    %v1046 = vpop.xlane.xlu0 %1045
    %v1047 = vsel %vm497, %v1043, 0.0
    %1048 = vadd.xlane.f32.xlu0 %v1047
    %v1049 = vpop.xlane.xlu0 %1048
    %v1050 = vrcp.pop %v1046
    %v1051 = vrcp.pop %v1049
    %v1052 = vmul.f32 %v1041, %v1050
    %v1053 = vmul.f32 %v1043, %v1051
    %v1055 = vsel %vm497, %v1052, 0
    %v1058 = vsel %vm497, %v1053, 0
    %1060 = vmatpush.msra.mxu0 0.0
    %1061 = vmatpush.msra.mxu0 0.0
    %1062 = vmatpush.msra.mxu0 0.0
    %1063 = vmatpush.msra.mxu0 0.0
    %1064 = vmatpush.msra.mxu0 0.0
    %1065 = vmatpush.msra.mxu0 0.0
    %1066 = vmatpush.msra.mxu0 0.0
    %1067 = vmatpush.msra.mxu0 0.0
    %1068 = vmatpush.msra.mxu0 0.0
    %1069 = vmatpush.msra.mxu0 0.0
    %1070 = vmatpush.msra.mxu0 0.0
    %1071 = vmatpush.msra.mxu0 0.0
    %1072 = vmatpush.msra.mxu0 0.0
    %1073 = vmatpush.msra.mxu0 0.0
    %1074 = vmatpush.msra.mxu0 %v993
    %1075 = vmatpush.msra.mxu0 %v990
    %1076 = vmatmul.f32.gmra.mxu0 %v1055
    %v1077 = vpop.f32.mrf.mxu0
    %v1078 = vadd.f32 0.0, %v1077
    %1079 = vmatmul.f32.gmra.mxu0 %v1058
    %v1080 = vpop.f32.mrf.mxu0
    %v1081 = vadd.f32 0.0, %v1080
    %1082 = vdwg.mxu0
    %1083 = vrot.lane.b32.xlu0 %v967, 96
    %v1084 = vpop.permute.xlu0 %1083
    %1085 = vrot.lane.b32.xlu0 %v970, 96
    %v1086 = vpop.permute.xlu0 %1085
    %1087 = vrot.lane.b32.xlu0 %v967, 32
    %v1088 = vpop.permute.xlu0 %1087
    %1089 = vrot.lane.b32.xlu0 %v970, 32
    %v1090 = vpop.permute.xlu0 %1089
    %v1091 = vsel %vm465, %v1084, 0
    %v1093 = vsel %vm465, %v1086, 0
    %v1095 = vsel %vm465, %v1088, 0
    %v1097 = vsel %vm465, %v1090, 0
    %1099 = vmatpush.xpose.msra.mxu0 0.0
    %1100 = vmatpush.xpose.msra.mxu0 0.0
    %1101 = vmatpush.xpose.msra.mxu0 0.0
    %1102 = vmatpush.xpose.msra.mxu0 0.0
    %1103 = vmatpush.xpose.msra.mxu0 0.0
    %1104 = vmatpush.xpose.msra.mxu0 0.0
    %1105 = vmatpush.xpose.msra.mxu0 0.0
    %1106 = vmatpush.xpose.msra.mxu0 0.0
    %1107 = vmatpush.xpose.msra.mxu0 0.0
    %1108 = vmatpush.xpose.msra.mxu0 0.0
    %1109 = vmatpush.xpose.msra.mxu0 0.0
    %1110 = vmatpush.xpose.msra.mxu0 0.0
    %1111 = vmatpush.xpose.msra.mxu0 0.0
    %1112 = vmatpush.xpose.msra.mxu0 0.0
    %1113 = vmatpush.xpose.msra.mxu0 %v1097
    %1114 = vmatpush.xpose.msra.mxu0 %v1095
    %1115 = vmatmul.f32.gmra.mxu0 %v1091
    %v1116 = vpop.f32.mrf.mxu0
    %v1117 = vadd.f32 %v295, %v1116
    %1118 = vmatmul.f32.gmra.mxu0 %v1093
    %v1119 = vpop.f32.mrf.mxu0
    %v1120 = vadd.f32 %v296, %v1119
    %1121 = vdwg.mxu0
    %v1122 = vsel %vm497, %v1117, -inf
    %1123 = vmax.xlane.f32.xlu0 %v1122
    %v1124 = vpop.xlane.xlu0 %1123
    %v1125 = vsel %vm497, %v1120, -inf
    %1126 = vmax.xlane.f32.xlu0 %v1125
    %v1127 = vpop.xlane.xlu0 %1126
    %v1128 = vsub.f32 %v1117, %v1124
    %v1129 = vsub.f32 %v1120, %v1127
    %v1130 = vmul.f32 %v1128, 1.442695
    %v1131 = vpow.pop %v1130
    %v1132 = vmul.f32 %v1129, 1.442695
    %v1133 = vpow.pop %v1132
    %v1134 = vsel %vm497, %v1131, 0.0
    %1135 = vadd.xlane.f32.xlu0 %v1134
    %v1136 = vpop.xlane.xlu0 %1135
    %v1137 = vsel %vm497, %v1133, 0.0
    %1138 = vadd.xlane.f32.xlu0 %v1137
    %v1139 = vpop.xlane.xlu0 %1138
    %v1140 = vrcp.pop %v1136
    %v1141 = vrcp.pop %v1139
    %v1142 = vmul.f32 %v1131, %v1140
    %v1143 = vmul.f32 %v1133, %v1141
    %1146 = vrot.lane.b32.xlu0 %v990, 96
    %v1147 = vpop.permute.xlu0 %1146
    %1148 = vrot.lane.b32.xlu0 %v993, 96
    %v1149 = vpop.permute.xlu0 %1148
    %v1153 = vsel %vm497, %v1142, 0
    %v1156 = vsel %vm497, %v1143, 0
    %1158 = vmatpush.msra.mxu0 0.0
    %1159 = vmatpush.msra.mxu0 0.0
    %1160 = vmatpush.msra.mxu0 0.0
    %1161 = vmatpush.msra.mxu0 0.0
    %1162 = vmatpush.msra.mxu0 0.0
    %1163 = vmatpush.msra.mxu0 0.0
    %1164 = vmatpush.msra.mxu0 0.0
    %1165 = vmatpush.msra.mxu0 0.0
    %1166 = vmatpush.msra.mxu0 0.0
    %1167 = vmatpush.msra.mxu0 0.0
    %1168 = vmatpush.msra.mxu0 0.0
    %1169 = vmatpush.msra.mxu0 0.0
    %1170 = vmatpush.msra.mxu0 0.0
    %1171 = vmatpush.msra.mxu0 0.0
    %1172 = vmatpush.msra.mxu0 %v1149
    %1173 = vmatpush.msra.mxu0 %v1147
    %1174 = vmatmul.f32.gmra.mxu0 %v1153
    %v1175 = vpop.f32.mrf.mxu0
    %v1176 = vadd.f32 0.0, %v1175
    %1177 = vmatmul.f32.gmra.mxu0 %v1156
    %v1178 = vpop.f32.mrf.mxu0
    %v1179 = vadd.f32 0.0, %v1178
    %1180 = vdwg.mxu0
    %v1182 = vsel %vm465, %v1176, 0
    %v1185 = vsel %vm465, %v1179, 0
    %1187 = vmatpush.msra.mxu0 0.0
    %1188 = vmatpush.msra.mxu0 0.0
    %1189 = vmatpush.msra.mxu0 0.0
    %1190 = vmatpush.msra.mxu0 0.0
    %1191 = vmatpush.msra.mxu0 0.0
    %1192 = vmatpush.msra.mxu0 0.0
    %1193 = vmatpush.msra.mxu0 0.0
    %1194 = vmatpush.msra.mxu0 0.0
    %1195 = vmatpush.msra.mxu0 0.0
    %1196 = vmatpush.msra.mxu0 0.0
    %1197 = vmatpush.msra.mxu0 0.0
    %1198 = vmatpush.msra.mxu0 0.0
    %1199 = vmatpush.msra.mxu0 %v864
    %1200 = vmatpush.msra.mxu0 %v863
    %1201 = vmatpush.msra.mxu0 %v862
    %1202 = vmatpush.msra.mxu0 %v861
    %1203 = vmatmul.f32.gmra.mxu0 %v1182
    %v1204 = vpop.f32.mrf.mxu0
    %v1205 = vadd.f32 0.0, %v1204
    %1206 = vmatmul.f32.gmra.mxu0 %v1185
    %v1207 = vpop.f32.mrf.mxu0
    %v1208 = vadd.f32 0.0, %v1207
    %1209 = vdwg.mxu0
    %v1211 = vsel %vm465, %v1078, 0
    %v1214 = vsel %vm465, %v1081, 0
    %1216 = vmatpush.msra.mxu0 0.0
    %1217 = vmatpush.msra.mxu0 0.0
    %1218 = vmatpush.msra.mxu0 0.0
    %1219 = vmatpush.msra.mxu0 0.0
    %1220 = vmatpush.msra.mxu0 0.0
    %1221 = vmatpush.msra.mxu0 0.0
    %1222 = vmatpush.msra.mxu0 0.0
    %1223 = vmatpush.msra.mxu0 0.0
    %1224 = vmatpush.msra.mxu0 0.0
    %1225 = vmatpush.msra.mxu0 0.0
    %1226 = vmatpush.msra.mxu0 0.0
    %1227 = vmatpush.msra.mxu0 0.0
    %1228 = vmatpush.msra.mxu0 %v860
    %1229 = vmatpush.msra.mxu0 %v859
    %1230 = vmatpush.msra.mxu0 %v858
    %1231 = vmatpush.msra.mxu0 %v857
    %1232 = vmatmul.f32.gmra.mxu0 %v1211
    %v1233 = vpop.f32.mrf.mxu0
    %v1234 = vadd.f32 %v1205, %v1233
    %1235 = vmatmul.f32.gmra.mxu0 %v1214
    %v1236 = vpop.f32.mrf.mxu0
    %v1237 = vadd.f32 %v1208, %v1236
    %1238 = vdwg.mxu0
    %v1239 = vadd.f32 %v834, %v1234
    %v1240 = vadd.f32 %v835, %v1237
    %v1241 = vperm.slane %v837, 3
    %v1242 = vadd.f32 %v1239, %v1241
    %v1243 = vadd.f32 %v1240, %v1241
    %v1244 = vsel %vm347, %v1242, 0.0
    %1245 = vadd.xlane.f32.xlu0 %v1244
    %v1246 = vpop.xlane.xlu0 %1245
    %v1247 = vsel %vm347, %v1243, 0.0
    %1248 = vadd.xlane.f32.xlu0 %v1247
    %v1249 = vpop.xlane.xlu0 %1248
    %v1250 = vmul.f32 %v1246, %v360
    %v1251 = vmul.f32 %v1249, %v360
    %v1252 = vsub.f32 %v1242, %v1250
    %v1253 = vsub.f32 %v1243, %v1251
    %v1254 = vmul.f32 %v1252, %v1252
    %v1255 = vmul.f32 %v1253, %v1253
    %v1256 = vsel %vm347, %v1254, 0.0
    %1257 = vadd.xlane.f32.xlu0 %v1256
    %v1258 = vpop.xlane.xlu0 %1257
    %v1259 = vsel %vm347, %v1255, 0.0
    %1260 = vadd.xlane.f32.xlu0 %v1259
    %v1261 = vpop.xlane.xlu0 %1260
    %v1262 = vmul.f32 %v1258, %v360
    %v1263 = vmul.f32 %v1261, %v360
    %v1264 = vadd.f32 %v1262, 1e-12
    %v1265 = vadd.f32 %v1263, 1e-12
    %v1266 = vrsqrt.pop %v1264
    %v1267 = vmul.f32 %v1266, %v1264
    %v1268 = vmul.f32 %v1267, %v1266
    %v1269 = vmul.f32 0.5, %v1268
    %v1270 = vsub.f32 1.5, %v1269
    %v1271 = vmul.f32 %v1266, %v1270
    %vm1272 = vweird.f32 %v1264
    %vm1273 = vweird.f32 %v1266
    %vm1274 = vmor %vm1272, %vm1273
    %v1275 = vsel %vm1274, %v1266, %v1271
    %v1276 = vrsqrt.pop %v1265
    %v1277 = vmul.f32 %v1276, %v1265
    %v1278 = vmul.f32 %v1277, %v1276
    %v1279 = vmul.f32 0.5, %v1278
    %v1280 = vsub.f32 1.5, %v1279
    %v1281 = vmul.f32 %v1276, %v1280
    %vm1282 = vweird.f32 %v1265
    %vm1283 = vweird.f32 %v1276
    %vm1284 = vmor %vm1282, %vm1283
    %v1285 = vsel %vm1284, %v1276, %v1281
    %v1286 = vmul.f32 %v1252, %v1275
    %v1287 = vmul.f32 %v1253, %v1285
    %v1288 = vperm.slane %v837, 4
    %v1289 = vmul.f32 %v1286, %v1288
    %v1290 = vmul.f32 %v1287, %v1288
    %v1291 = vperm.slane %v837, 5
    %v1292 = vadd.f32 %v1289, %v1291
    %v1293 = vadd.f32 %v1290, %v1291
    %v1294 = vperm.slane %v837, 6
    %v1296 = vsel %vm347, %v1292, 0
    %v1299 = vsel %vm347, %v1293, 0
    %1301 = vmatpush.msra.mxu0 0.0
    %1302 = vmatpush.msra.mxu0 0.0
    %1303 = vmatpush.msra.mxu0 0.0
    %1304 = vmatpush.msra.mxu0 0.0
    %1305 = vmatpush.msra.mxu0 0.0
    %1306 = vmatpush.msra.mxu0 0.0
    %1307 = vmatpush.msra.mxu0 0.0
    %1308 = vmatpush.msra.mxu0 0.0
    %1309 = vmatpush.msra.mxu0 %v873
    %1310 = vmatpush.msra.mxu0 %v872
    %1311 = vmatpush.msra.mxu0 %v871
    %1312 = vmatpush.msra.mxu0 %v870
    %1313 = vmatpush.msra.mxu0 %v869
    %1314 = vmatpush.msra.mxu0 %v868
    %1315 = vmatpush.msra.mxu0 %v867
    %1316 = vmatpush.msra.mxu0 %v866
    %1317 = vmatmul.f32.gmra.mxu0 %v1296
    %v1318 = vpop.f32.mrf.mxu0
    %v1319 = vadd.f32 %v1294, %v1318
    %1320 = vmatmul.f32.gmra.mxu0 %v1299
    %v1321 = vpop.f32.mrf.mxu0
    %v1322 = vadd.f32 %v1294, %v1321
    %1323 = vdwg.mxu0
    %v1324 = vmul.f32 %v1319, %v1319
    %v1325 = vmul.f32 %v1322, %v1322
    %v1326 = vmul.f32 %v1319, %v1324
    %v1327 = vmul.f32 %v1322, %v1325
    %v1328 = vmul.f32 %v1326, 0.044715
    %v1329 = vmul.f32 %v1327, 0.044715
    %v1330 = vadd.f32 %v1319, %v1328
    %v1331 = vadd.f32 %v1322, %v1329
    %v1332 = vmul.f32 %v1330, 0.7978846
    %v1333 = vmul.f32 %v1331, 0.7978846
    %v1334 = vtanh.pop %v1332
    %v1335 = vtanh.pop %v1333
    %v1336 = vadd.f32 %v1334, 1.0
    %v1337 = vadd.f32 %v1335, 1.0
    %v1338 = vmul.f32 %v1336, 0.5
    %v1339 = vmul.f32 %v1337, 0.5
    %v1340 = vmul.f32 %v1319, %v1338
    %v1341 = vmul.f32 %v1322, %v1339
    %1342 = vmatpush.msra.mxu0 %v890
    %1343 = vmatpush.msra.mxu0 %v889
    %1344 = vmatpush.msra.mxu0 %v888
    %1345 = vmatpush.msra.mxu0 %v887
    %1346 = vmatpush.msra.mxu0 %v886
    %1347 = vmatpush.msra.mxu0 %v885
    %1348 = vmatpush.msra.mxu0 %v884
    %1349 = vmatpush.msra.mxu0 %v883
    %1350 = vmatpush.msra.mxu0 %v882
    %1351 = vmatpush.msra.mxu0 %v881
    %1352 = vmatpush.msra.mxu0 %v880
    %1353 = vmatpush.msra.mxu0 %v879
    %1354 = vmatpush.msra.mxu0 %v878
    %1355 = vmatpush.msra.mxu0 %v877
    %1356 = vmatpush.msra.mxu0 %v876
    %1357 = vmatpush.msra.mxu0 %v875
    %1358 = vmatmul.f32.gmra.mxu0 %v1340
    %v1359 = vpop.f32.mrf.mxu0
    %v1360 = vadd.f32 0.0, %v1359
    %1361 = vmatmul.f32.gmra.mxu0 %v1341
    %v1362 = vpop.f32.mrf.mxu0
    %v1363 = vadd.f32 0.0, %v1362
    %1364 = vdwg.mxu0
    %v1365 = vadd.f32 %v1242, %v1360
    %v1366 = vadd.f32 %v1243, %v1363
    %v1367 = vperm.slane %v837, 7
    %v1368 = vadd.f32 %v1365, %v1367
    %v1369 = vadd.f32 %v1366, %v1367
    %v1370 = vld [vmem:[%s5] sm:$0x3]
    %v1372 = vsel %vm497, %v1370, 0
    %1374 = vmatpush.msra.mxu0 0.0
    %1375 = vmatpush.msra.mxu0 0.0
    %1376 = vmatpush.msra.mxu0 0.0
    %1377 = vmatpush.msra.mxu0 0.0
    %1378 = vmatpush.msra.mxu0 0.0
    %1379 = vmatpush.msra.mxu0 0.0
    %1380 = vmatpush.msra.mxu0 0.0
    %1381 = vmatpush.msra.mxu0 0.0
    %1382 = vmatpush.msra.mxu0 0.0
    %1383 = vmatpush.msra.mxu0 0.0
    %1384 = vmatpush.msra.mxu0 0.0
    %1385 = vmatpush.msra.mxu0 0.0
    %1386 = vmatpush.msra.mxu0 0.0
    %1387 = vmatpush.msra.mxu0 0.0
    %1388 = vmatpush.msra.mxu0 %v1369
    %1389 = vmatpush.msra.mxu0 %v1368
    %1390 = vmatmul.f32.gmra.mxu0 %v1372
    %v1391 = vpop.f32.mrf.mxu0
    %v1392 = vadd.f32 0.0, %v1391
    %1393 = vdwg.mxu0
    %vm1394 = vcmask 517120
    %1395 = vst.msk [vmem:[#allocation2] sm:$0x3] %vm1394, %v1392
    // Predicated region
    $region46: #{tpu_custom_call.1} parent=1 // pred_check
      _
    $region47: #{tpu_custom_call.1} parent=1 // pred_check_branch
      %1397 = sbr.rel (0) target = $region49
    $region48: #{tpu_custom_call.1} parent=1 // pred_region
      %1399 = vsyncadd [#allocation3], 0
      %s1401 = sshll.u32 [#allocation2], 4
      %s1402 = int_to_ptr.vmem [resolvable:$true] %s1401
      %s1403 = sshll.u32 %s11, 4
      %s1404 = int_to_ptr.hbm [resolvable:$true] %s1403
      %1406 = dma.vmem_to_hbm [thread:$0]  %s1402, 32, %s1404, [#allocation3]
    $region49: #{tpu_custom_call.1} parent=1 // pred_fallthru
      _
    // Predicated region
    $region50: #{tpu_custom_call.1} parent=1 // pred_check
      _
    $region51: #{tpu_custom_call.1} parent=1 // pred_check_branch
      %1408 = sbr.rel (0) target = $region53
    $region52: #{tpu_custom_call.1} parent=1 // pred_region
      %1410 = dma.done [#allocation3], 32
    $region53: #{tpu_custom_call.1} parent=1 // pred_fallthru
      _
    %1411 = vsyncpa [#allocation3], 1

</llo_original>
